<compile_context>
chip_gen: v7x
topology: tpu7x:2x2x1
jax: 0.10.0
libtpu: 0.0.40
codegen_flags: <defaults>
</compile_context>

<pallas_src>
import jax
import jax.numpy as jnp
import numpy as np
from jax import lax
from jax.experimental import pallas as pl
from jax.experimental.pallas import tpu as pltpu


# -----------------------------------------------------------------------------
# Fused Pallas kernel (one grid step == one image)
# -----------------------------------------------------------------------------
def _cnn_fused_kernel(p1_ref, w1_ref, b1_ref, w2_ref, b2_ref, wfc_ref, bfc_ref,
                      out_ref, h1_ref, h1pad_ref, y2_ref):
    f32 = jnp.float32

    # ---- Stage 1: conv1 as ONE stacked patch matmul over the 4 pooling taps.
    # p1 rows: [32*t + (i*5+j)] for pooling tap t=(a*2+b); cols ordered (di*2+dj).
    # Rows 25..31 of each 32-row tap block are zero padding (aligned slices).
    y1 = jnp.dot(p1_ref[0], w1_ref[...], preferred_element_type=f32)       # (128, 8)
    m1 = jnp.maximum(jnp.maximum(y1[0:32, :], y1[32:64, :]),
                     jnp.maximum(y1[64:96, :], y1[96:128, :]))             # (32, 8)
    # bias + ReLU hoisted after the pooling max (exactly equivalent, ~4x fewer VPU ops)
    h1_ref[...] = jnp.maximum(m1 + b1_ref[...], 0.0)                       # rows 0..24 valid

    # ---- Stage 2: conv2 on the VMEM-resident h1 (5x5x8, pad=1 -> 7x7x8).
    # Padded image stored row-flattened (flat index = r*7 + c) in a zeroed
    # (56, 8) scratch; rows 49..55 only feed wrap rows that are never read.
    h1pad_ref[...] = jnp.zeros_like(h1pad_ref)
    for i in range(5):
        h1pad_ref[7 * i + 8:7 * i + 13, :] = h1_ref[5 * i:5 * i + 5, :]

    # conv2 = sum over the 4 kernel offsets (di,dj) of a shifted (42,8)x(8,64)
    # matmul accumulated in f32; output row m = 7*u + v (v == 6 is wrap junk).
    y2 = None
    for di in range(2):
        for dj in range(2):
            t = di * 2 + dj
            x_t = h1pad_ref[7 * di + dj:7 * di + dj + 42, :]               # (42, 8)
            part = jnp.dot(x_t, w2_ref[8 * t:8 * t + 8, :],
                           preferred_element_type=f32)                     # (42, 64)
            y2 = part if y2 is None else y2 + part
    y2_ref[...] = y2

    # ---- 2x2/2 max-pool (+ hoisted bias/ReLU) fused into the FC: logits
    # accumulate over the 9 pooled spatial positions, so the flattened feature
    # vector / NHWC->NCHW transpose never materializes.
    b2 = b2_ref[...]                                                        # (1, 64)
    logits = bfc_ref[...]                                                   # (1, 4)
    for i in range(3):
        for j in range(3):
            r = 14 * i + 2 * j
            pooled = jnp.maximum(
                jnp.maximum(y2_ref[r:r + 1, :], y2_ref[r + 1:r + 2, :]),
                jnp.maximum(y2_ref[r + 7:r + 8, :], y2_ref[r + 8:r + 9, :]))
            pooled = jnp.maximum(pooled + b2, 0.0)                          # (1, 64)
            logits = logits + jnp.dot(pooled, wfc_ref[i * 3 + j],
                                      preferred_element_type=f32)           # (1, 4)

    # ---- log_softmax over the class axis
    m = jnp.max(logits, axis=-1, keepdims=True)
    s = logits - m
    lse = jnp.log(jnp.sum(jnp.exp(s), axis=-1, keepdims=True))
    out_ref[0] = s - lse


# -----------------------------------------------------------------------------
# Host-side glue (pure layout on the tiny raw input; fuses into one XLA gather)
# -----------------------------------------------------------------------------
def _conv1_tap_patches(x):
    """x: (B, 10, 10) -> (B, 128, 4) stacked pooling-tap im2col patches.

    Rows [32*t + i*5 + j] for pooling tap t = a*2 + b hold the 2x2 patch of
    conv1-output pixel (2i+a, 2j+b); rows 25..31 of each tap block are zero
    padding (keeps the tap blocks sublane-aligned). Columns ordered (di*2+dj).
    """
    B = x.shape[0]
    xpad = jnp.pad(x, ((0, 0), (1, 1), (1, 1)))                    # (B, 12, 12)
    blocks = []
    for a in (0, 1):
        for b in (0, 1):
            cols = [
                xpad[:, a + di:a + di + 10:2, b + dj:b + dj + 10:2].reshape(B, 25, 1)
                for di in (0, 1) for dj in (0, 1)
            ]
            blk = jnp.concatenate(cols, axis=-1)                   # (B, 25, 4)
            blocks.append(jnp.pad(blk, ((0, 0), (0, 7), (0, 0))))  # (B, 32, 4)
    return jnp.concatenate(blocks, axis=1)                         # (B, 128, 4)


@jax.jit
def cnn_forward(x_nchw, params):
    """Pallas forward. Input NCHW (B, 1, 10, 10) -> (B, 4) log-probs."""
    B = x_nchw.shape[0]
    x = x_nchw[:, 0, :, :]                                          # (B, 10, 10)
    p1 = _conv1_tap_patches(x)                                      # (B, 128, 4)

    # One-time (trace-time) weight re-layouts; constant-folded by XLA.
    w1 = jnp.transpose(params["conv1_w"], (2, 3, 1, 0)).reshape(4, 8)     # (di*2+dj, cout)
    b1 = params["conv1_b"].reshape(1, 8)
    w2 = jnp.transpose(params["conv2_w"], (2, 3, 1, 0)).reshape(32, 64)   # ((di*2+dj)*8+cin, cout)
    b2 = params["conv2_b"].reshape(1, 64)
    # fc weight permuted so the kernel's NHWC spatial-major feature order needs
    # no activation transpose: wfc[p=i*3+j, ch, class]
    wfc = jnp.transpose(params["fc_w"].reshape(4, 64, 9), (2, 1, 0))      # (9, 64, 4)
    bfc = params["fc_b"].reshape(1, 4)

    out = pl.pallas_call(
        _cnn_fused_kernel,
        out_shape=jax.ShapeDtypeStruct((B, 1, 4), jnp.float32),
        grid_spec=pltpu.PrefetchScalarGridSpec(
            num_scalar_prefetch=0,
            grid=(B,),
            in_specs=[
                pl.BlockSpec((1, 128, 4), lambda b: (b, 0, 0)),   # p1
                pl.BlockSpec((4, 8), lambda b: (0, 0)),           # w1
                pl.BlockSpec((1, 8), lambda b: (0, 0)),           # b1
                pl.BlockSpec((32, 64), lambda b: (0, 0)),         # w2
                pl.BlockSpec((1, 64), lambda b: (0, 0)),          # b2
                pl.BlockSpec((9, 64, 4), lambda b: (0, 0, 0)),    # wfc
                pl.BlockSpec((1, 4), lambda b: (0, 0)),           # bfc
            ],
            out_specs=pl.BlockSpec((1, 1, 4), lambda b: (b, 0, 0)),
            scratch_shapes=[
                pltpu.VMEM((32, 8), jnp.float32),    # h1  (pooled conv1, rows 0..24 valid)
                pltpu.VMEM((56, 8), jnp.float32),    # flattened zero-padded conv2 input
                pltpu.VMEM((42, 64), jnp.float32),   # conv2 pre-activation output
            ],
        ),
        compiler_params=pltpu.CompilerParams(
            dimension_semantics=("parallel",),       # shard batch across TCs on v7x
        ),
    )(p1, w1, b1, w2, b2, wfc, bfc)
    return out[:, 0, :]


# -----------------------------------------------------------------------------
# Pure-JAX reference (correctness check only)
# -----------------------------------------------------------------------------
def cnn_reference(x, params):
    def conv(x, w, b):
        y = lax.conv_general_dilated(
            x, w, window_strides=(1, 1), padding=((1, 1), (1, 1)),
            dimension_numbers=("NCHW", "OIHW", "NCHW"))
        return y + b.reshape(1, -1, 1, 1)

    def maxpool(x):
        return lax.reduce_window(x, -jnp.inf, lax.max,
                                 (1, 1, 2, 2), (1, 1, 2, 2), "VALID")

    h = maxpool(jax.nn.relu(conv(x, params["conv1_w"], params["conv1_b"])))
    h = maxpool(jax.nn.relu(conv(h, params["conv2_w"], params["conv2_b"])))
    h = h.reshape(h.shape[0], -1)
    logits = h @ params["fc_w"].T + params["fc_b"]
    return jax.nn.log_softmax(logits, axis=1)


def init_params(key):
    k1, k2, k3, k4, k5, k6 = jax.random.split(key, 6)
    return {
        "conv1_w": 0.20 * jax.random.normal(k1, (8, 1, 2, 2), jnp.float32),
        "conv1_b": 0.10 * jax.random.normal(k2, (8,), jnp.float32),
        "conv2_w": 0.05 * jax.random.normal(k3, (64, 8, 2, 2), jnp.float32),
        "conv2_b": 0.10 * jax.random.normal(k4, (64,), jnp.float32),
        "fc_w": 0.02 * jax.random.normal(k5, (4, 576), jnp.float32),
        "fc_b": 0.10 * jax.random.normal(k6, (4,), jnp.float32),
    }


if __name__ == "__main__":
    key = jax.random.PRNGKey(0)
    kx, kp = jax.random.split(key)
    # fc1 expects 576 = 64*3*3 features -> input spatial size 10x10, in_channels=1.
    x = jax.random.normal(kx, (2, 1, 10, 10), jnp.float32)
    params = init_params(kp)

    out = jax.block_until_ready(cnn_forward(x, params))

    ref = jax.block_until_ready(cnn_reference(x, params))
    np.testing.assert_allclose(np.asarray(out), np.asarray(ref), rtol=1e-4, atol=1e-4)

    assert out.shape == (2, 4)
    print("KERNEL_OK")
</pallas_src>

<mosaic_0001>
module attributes {stable_mosaic.version = 11 : i64} {
  func.func @_cnn_fused_kernel(%arg0: i32, %arg1: memref<1x128x4xf32, #tpu.memory_space<vmem>>, %arg2: memref<4x8xf32, #tpu.memory_space<vmem>>, %arg3: memref<1x8xf32, #tpu.memory_space<vmem>>, %arg4: memref<32x64xf32, #tpu.memory_space<vmem>>, %arg5: memref<1x64xf32, #tpu.memory_space<vmem>>, %arg6: memref<9x64x4xf32, #tpu.memory_space<vmem>>, %arg7: memref<1x4xf32, #tpu.memory_space<vmem>>, %arg8: memref<1x1x4xf32, #tpu.memory_space<vmem>>, %arg9: memref<32x8xf32, #tpu.memory_space<vmem>>, %arg10: memref<56x8xf32, #tpu.memory_space<vmem>>, %arg11: memref<42x64xf32, #tpu.memory_space<vmem>>) attributes {dimension_semantics = [#tpu.dimension_semantics<parallel>], iteration_bounds = array<i64: 2>, scalar_prefetch = 0 : i64, scratch_operands = 3 : i64, tpu.core_type = #tpu.core_type<tc>, window_params = [{transform_indices = @transform_0, window_bounds = array<i64: 1, 128, 4>}, {pipeline_mode = #tpu.pipeline_mode<synchronous>, transform_indices = @transform_1, window_bounds = array<i64: 4, 8>}, {pipeline_mode = #tpu.pipeline_mode<synchronous>, transform_indices = @transform_2, window_bounds = array<i64: 1, 8>}, {pipeline_mode = #tpu.pipeline_mode<synchronous>, transform_indices = @transform_3, window_bounds = array<i64: 32, 64>}, {pipeline_mode = #tpu.pipeline_mode<synchronous>, transform_indices = @transform_4, window_bounds = array<i64: 1, 64>}, {pipeline_mode = #tpu.pipeline_mode<synchronous>, transform_indices = @transform_5, window_bounds = array<i64: 9, 64, 4>}, {pipeline_mode = #tpu.pipeline_mode<synchronous>, transform_indices = @transform_6, window_bounds = array<i64: 1, 4>}, {transform_indices = @transform_7, window_bounds = array<i64: 1, 1, 4>}]} {
    %c0 = arith.constant 0 : index
    %c0_0 = arith.constant 0 : index
    %c0_1 = arith.constant 0 : index
    %0 = vector.load %arg1[%c0, %c0_0, %c0_1] : memref<1x128x4xf32, #tpu.memory_space<vmem>>, vector<1x128x4xf32>
    %1 = vector.shape_cast %0 : vector<1x128x4xf32> to vector<128x4xf32>
    %c0_2 = arith.constant 0 : index
    %c0_3 = arith.constant 0 : index
    %2 = vector.load %arg2[%c0_2, %c0_3] : memref<4x8xf32, #tpu.memory_space<vmem>>, vector<4x8xf32>
    %cst = arith.constant dense<0.000000e+00> : vector<128x8xf32>
    %3 = tpu.matmul %1, %2, %cst {dimension_numbers = #tpu.dot_dimension_numbers<[1], [0], [0], [1], [0, 0, 1, 1], [], []>} : vector<128x4xf32>, vector<4x8xf32>, vector<128x8xf32> -> vector<128x8xf32>
    %4 = vector.extract_strided_slice %3 {offsets = [0, 0], sizes = [32, 8], strides = [1, 1]} : vector<128x8xf32> to vector<32x8xf32>
    %5 = vector.extract_strided_slice %3 {offsets = [32, 0], sizes = [32, 8], strides = [1, 1]} : vector<128x8xf32> to vector<32x8xf32>
    %6 = arith.maximumf %4, %5 : vector<32x8xf32>
    %7 = vector.extract_strided_slice %3 {offsets = [64, 0], sizes = [32, 8], strides = [1, 1]} : vector<128x8xf32> to vector<32x8xf32>
    %8 = vector.extract_strided_slice %3 {offsets = [96, 0], sizes = [32, 8], strides = [1, 1]} : vector<128x8xf32> to vector<32x8xf32>
    %9 = arith.maximumf %7, %8 : vector<32x8xf32>
    %10 = arith.maximumf %6, %9 : vector<32x8xf32>
    %c0_4 = arith.constant 0 : index
    %c0_5 = arith.constant 0 : index
    %11 = vector.load %arg3[%c0_4, %c0_5] : memref<1x8xf32, #tpu.memory_space<vmem>>, vector<1x8xf32>
    %12 = vector.broadcast %11 : vector<1x8xf32> to vector<32x8xf32>
    %13 = arith.addf %10, %12 : vector<32x8xf32>
    %cst_6 = arith.constant 0.000000e+00 : f32
    %14 = vector.broadcast %cst_6 : f32 to vector<32x8xf32>
    %15 = arith.maximumf %13, %14 : vector<32x8xf32>
    %c0_7 = arith.constant 0 : index
    %c0_8 = arith.constant 0 : index
    %16 = vector.load %arg9[%c0_7, %c0_8] : memref<32x8xf32, #tpu.memory_space<vmem>>, vector<32x8xf32>
    tpu.vector_store %arg9[%c0_7, %c0_8], %15 {strides = array<i32>} : memref<32x8xf32, #tpu.memory_space<vmem>>, vector<32x8xf32>,
    %cst_9 = arith.constant 0.000000e+00 : f32
    %17 = vector.broadcast %cst_9 : f32 to vector<56x8xf32>
    %c0_10 = arith.constant 0 : index
    %c0_11 = arith.constant 0 : index
    %18 = vector.load %arg10[%c0_10, %c0_11] : memref<56x8xf32, #tpu.memory_space<vmem>>, vector<56x8xf32>
    tpu.vector_store %arg10[%c0_10, %c0_11], %17 {strides = array<i32>} : memref<56x8xf32, #tpu.memory_space<vmem>>, vector<56x8xf32>,
    %c0_12 = arith.constant 0 : index
    %c0_13 = arith.constant 0 : index
    %19 = vector.load %arg9[%c0_12, %c0_13] : memref<32x8xf32, #tpu.memory_space<vmem>>, vector<5x8xf32>
    %c8 = arith.constant 8 : index
    %c0_14 = arith.constant 0 : index
    %20 = vector.load %arg10[%c8, %c0_14] : memref<56x8xf32, #tpu.memory_space<vmem>>, vector<5x8xf32>
    tpu.vector_store %arg10[%c8, %c0_14], %19 {strides = array<i32>} : memref<56x8xf32, #tpu.memory_space<vmem>>, vector<5x8xf32>,
    %c5 = arith.constant 5 : index
    %c0_15 = arith.constant 0 : index
    %21 = vector.load %arg9[%c5, %c0_15] : memref<32x8xf32, #tpu.memory_space<vmem>>, vector<5x8xf32>
    %c15 = arith.constant 15 : index
    %c0_16 = arith.constant 0 : index
    %22 = vector.load %arg10[%c15, %c0_16] : memref<56x8xf32, #tpu.memory_space<vmem>>, vector<5x8xf32>
    tpu.vector_store %arg10[%c15, %c0_16], %21 {strides = array<i32>} : memref<56x8xf32, #tpu.memory_space<vmem>>, vector<5x8xf32>,
    %c10 = arith.constant 10 : index
    %c0_17 = arith.constant 0 : index
    %23 = vector.load %arg9[%c10, %c0_17] : memref<32x8xf32, #tpu.memory_space<vmem>>, vector<5x8xf32>
    %c22 = arith.constant 22 : index
    %c0_18 = arith.constant 0 : index
    %24 = vector.load %arg10[%c22, %c0_18] : memref<56x8xf32, #tpu.memory_space<vmem>>, vector<5x8xf32>
    tpu.vector_store %arg10[%c22, %c0_18], %23 {strides = array<i32>} : memref<56x8xf32, #tpu.memory_space<vmem>>, vector<5x8xf32>,
    %c15_19 = arith.constant 15 : index
    %c0_20 = arith.constant 0 : index
    %25 = vector.load %arg9[%c15_19, %c0_20] : memref<32x8xf32, #tpu.memory_space<vmem>>, vector<5x8xf32>
    %c29 = arith.constant 29 : index
    %c0_21 = arith.constant 0 : index
    %26 = vector.load %arg10[%c29, %c0_21] : memref<56x8xf32, #tpu.memory_space<vmem>>, vector<5x8xf32>
    tpu.vector_store %arg10[%c29, %c0_21], %25 {strides = array<i32>} : memref<56x8xf32, #tpu.memory_space<vmem>>, vector<5x8xf32>,
    %c20 = arith.constant 20 : index
    %c0_22 = arith.constant 0 : index
    %27 = vector.load %arg9[%c20, %c0_22] : memref<32x8xf32, #tpu.memory_space<vmem>>, vector<5x8xf32>
    %c36 = arith.constant 36 : index
    %c0_23 = arith.constant 0 : index
    %28 = vector.load %arg10[%c36, %c0_23] : memref<56x8xf32, #tpu.memory_space<vmem>>, vector<5x8xf32>
    tpu.vector_store %arg10[%c36, %c0_23], %27 {strides = array<i32>} : memref<56x8xf32, #tpu.memory_space<vmem>>, vector<5x8xf32>,
    %c0_24 = arith.constant 0 : index
    %c0_25 = arith.constant 0 : index
    %29 = vector.load %arg10[%c0_24, %c0_25] : memref<56x8xf32, #tpu.memory_space<vmem>>, vector<42x8xf32>
    %c0_26 = arith.constant 0 : index
    %c0_27 = arith.constant 0 : index
    %30 = vector.load %arg4[%c0_26, %c0_27] : memref<32x64xf32, #tpu.memory_space<vmem>>, vector<8x64xf32>
    %cst_28 = arith.constant dense<0.000000e+00> : vector<42x64xf32>
    %31 = tpu.matmul %29, %30, %cst_28 {dimension_numbers = #tpu.dot_dimension_numbers<[1], [0], [0], [1], [0, 0, 1, 1], [], []>} : vector<42x8xf32>, vector<8x64xf32>, vector<42x64xf32> -> vector<42x64xf32>
    %c1 = arith.constant 1 : index
    %c0_29 = arith.constant 0 : index
    %32 = vector.load %arg10[%c1, %c0_29] : memref<56x8xf32, #tpu.memory_space<vmem>>, vector<42x8xf32>
    %c8_30 = arith.constant 8 : index
    %c0_31 = arith.constant 0 : index
    %33 = vector.load %arg4[%c8_30, %c0_31] : memref<32x64xf32, #tpu.memory_space<vmem>>, vector<8x64xf32>
    %cst_32 = arith.constant dense<0.000000e+00> : vector<42x64xf32>
    %34 = tpu.matmul %32, %33, %cst_32 {dimension_numbers = #tpu.dot_dimension_numbers<[1], [0], [0], [1], [0, 0, 1, 1], [], []>} : vector<42x8xf32>, vector<8x64xf32>, vector<42x64xf32> -> vector<42x64xf32>
    %35 = arith.addf %31, %34 : vector<42x64xf32>
    %c7 = arith.constant 7 : index
    %c0_33 = arith.constant 0 : index
    %36 = vector.load %arg10[%c7, %c0_33] : memref<56x8xf32, #tpu.memory_space<vmem>>, vector<42x8xf32>
    %c16 = arith.constant 16 : index
    %c0_34 = arith.constant 0 : index
    %37 = vector.load %arg4[%c16, %c0_34] : memref<32x64xf32, #tpu.memory_space<vmem>>, vector<8x64xf32>
    %cst_35 = arith.constant dense<0.000000e+00> : vector<42x64xf32>
    %38 = tpu.matmul %36, %37, %cst_35 {dimension_numbers = #tpu.dot_dimension_numbers<[1], [0], [0], [1], [0, 0, 1, 1], [], []>} : vector<42x8xf32>, vector<8x64xf32>, vector<42x64xf32> -> vector<42x64xf32>
    %39 = arith.addf %35, %38 : vector<42x64xf32>
    %c8_36 = arith.constant 8 : index
    %c0_37 = arith.constant 0 : index
    %40 = vector.load %arg10[%c8_36, %c0_37] : memref<56x8xf32, #tpu.memory_space<vmem>>, vector<42x8xf32>
    %c24 = arith.constant 24 : index
    %c0_38 = arith.constant 0 : index
    %41 = vector.load %arg4[%c24, %c0_38] : memref<32x64xf32, #tpu.memory_space<vmem>>, vector<8x64xf32>
    %cst_39 = arith.constant dense<0.000000e+00> : vector<42x64xf32>
    %42 = tpu.matmul %40, %41, %cst_39 {dimension_numbers = #tpu.dot_dimension_numbers<[1], [0], [0], [1], [0, 0, 1, 1], [], []>} : vector<42x8xf32>, vector<8x64xf32>, vector<42x64xf32> -> vector<42x64xf32>
    %43 = arith.addf %39, %42 : vector<42x64xf32>
    %c0_40 = arith.constant 0 : index
    %c0_41 = arith.constant 0 : index
    %44 = vector.load %arg11[%c0_40, %c0_41] : memref<42x64xf32, #tpu.memory_space<vmem>>, vector<42x64xf32>
    tpu.vector_store %arg11[%c0_40, %c0_41], %43 {strides = array<i32>} : memref<42x64xf32, #tpu.memory_space<vmem>>, vector<42x64xf32>,
    %c0_42 = arith.constant 0 : index
    %c0_43 = arith.constant 0 : index
    %45 = vector.load %arg5[%c0_42, %c0_43] : memref<1x64xf32, #tpu.memory_space<vmem>>, vector<1x64xf32>
    %c0_44 = arith.constant 0 : index
    %c0_45 = arith.constant 0 : index
    %46 = vector.load %arg7[%c0_44, %c0_45] : memref<1x4xf32, #tpu.memory_space<vmem>>, vector<1x4xf32>
    %c0_46 = arith.constant 0 : index
    %c0_47 = arith.constant 0 : index
    %47 = vector.load %arg11[%c0_46, %c0_47] : memref<42x64xf32, #tpu.memory_space<vmem>>, vector<1x64xf32>
    %c1_48 = arith.constant 1 : index
    %c0_49 = arith.constant 0 : index
    %48 = vector.load %arg11[%c1_48, %c0_49] : memref<42x64xf32, #tpu.memory_space<vmem>>, vector<1x64xf32>
    %49 = arith.maximumf %47, %48 : vector<1x64xf32>
    %c7_50 = arith.constant 7 : index
    %c0_51 = arith.constant 0 : index
    %50 = vector.load %arg11[%c7_50, %c0_51] : memref<42x64xf32, #tpu.memory_space<vmem>>, vector<1x64xf32>
    %c8_52 = arith.constant 8 : index
    %c0_53 = arith.constant 0 : index
    %51 = vector.load %arg11[%c8_52, %c0_53] : memref<42x64xf32, #tpu.memory_space<vmem>>, vector<1x64xf32>
    %52 = arith.maximumf %50, %51 : vector<1x64xf32>
    %53 = arith.maximumf %49, %52 : vector<1x64xf32>
    %54 = arith.addf %53, %45 : vector<1x64xf32>
    %cst_54 = arith.constant 0.000000e+00 : f32
    %55 = vector.broadcast %cst_54 : f32 to vector<1x64xf32>
    %56 = arith.maximumf %54, %55 : vector<1x64xf32>
    %c0_55 = arith.constant 0 : index
    %c0_56 = arith.constant 0 : index
    %c0_57 = arith.constant 0 : index
    %57 = vector.load %arg6[%c0_55, %c0_56, %c0_57] : memref<9x64x4xf32, #tpu.memory_space<vmem>>, vector<1x64x4xf32>
    %58 = vector.shape_cast %57 : vector<1x64x4xf32> to vector<64x4xf32>
    %cst_58 = arith.constant dense<0.000000e+00> : vector<1x4xf32>
    %59 = tpu.matmul %56, %58, %cst_58 {dimension_numbers = #tpu.dot_dimension_numbers<[1], [0], [0], [1], [0, 0, 1, 1], [], []>} : vector<1x64xf32>, vector<64x4xf32>, vector<1x4xf32> -> vector<1x4xf32>
    %60 = arith.addf %46, %59 : vector<1x4xf32>
    %c2 = arith.constant 2 : index
    %c0_59 = arith.constant 0 : index
    %61 = vector.load %arg11[%c2, %c0_59] : memref<42x64xf32, #tpu.memory_space<vmem>>, vector<1x64xf32>
    %c3 = arith.constant 3 : index
    %c0_60 = arith.constant 0 : index
    %62 = vector.load %arg11[%c3, %c0_60] : memref<42x64xf32, #tpu.memory_space<vmem>>, vector<1x64xf32>
    %63 = arith.maximumf %61, %62 : vector<1x64xf32>
    %c9 = arith.constant 9 : index
    %c0_61 = arith.constant 0 : index
    %64 = vector.load %arg11[%c9, %c0_61] : memref<42x64xf32, #tpu.memory_space<vmem>>, vector<1x64xf32>
    %c10_62 = arith.constant 10 : index
    %c0_63 = arith.constant 0 : index
    %65 = vector.load %arg11[%c10_62, %c0_63] : memref<42x64xf32, #tpu.memory_space<vmem>>, vector<1x64xf32>
    %66 = arith.maximumf %64, %65 : vector<1x64xf32>
    %67 = arith.maximumf %63, %66 : vector<1x64xf32>
    %68 = arith.addf %67, %45 : vector<1x64xf32>
    %cst_64 = arith.constant 0.000000e+00 : f32
    %69 = vector.broadcast %cst_64 : f32 to vector<1x64xf32>
    %70 = arith.maximumf %68, %69 : vector<1x64xf32>
    %c1_65 = arith.constant 1 : index
    %c0_66 = arith.constant 0 : index
    %c0_67 = arith.constant 0 : index
    %71 = vector.load %arg6[%c1_65, %c0_66, %c0_67] : memref<9x64x4xf32, #tpu.memory_space<vmem>>, vector<1x64x4xf32>
    %72 = vector.shape_cast %71 : vector<1x64x4xf32> to vector<64x4xf32>
    %cst_68 = arith.constant dense<0.000000e+00> : vector<1x4xf32>
    %73 = tpu.matmul %70, %72, %cst_68 {dimension_numbers = #tpu.dot_dimension_numbers<[1], [0], [0], [1], [0, 0, 1, 1], [], []>} : vector<1x64xf32>, vector<64x4xf32>, vector<1x4xf32> -> vector<1x4xf32>
    %74 = arith.addf %60, %73 : vector<1x4xf32>
    %c4 = arith.constant 4 : index
    %c0_69 = arith.constant 0 : index
    %75 = vector.load %arg11[%c4, %c0_69] : memref<42x64xf32, #tpu.memory_space<vmem>>, vector<1x64xf32>
    %c5_70 = arith.constant 5 : index
    %c0_71 = arith.constant 0 : index
    %76 = vector.load %arg11[%c5_70, %c0_71] : memref<42x64xf32, #tpu.memory_space<vmem>>, vector<1x64xf32>
    %77 = arith.maximumf %75, %76 : vector<1x64xf32>
    %c11 = arith.constant 11 : index
    %c0_72 = arith.constant 0 : index
    %78 = vector.load %arg11[%c11, %c0_72] : memref<42x64xf32, #tpu.memory_space<vmem>>, vector<1x64xf32>
    %c12 = arith.constant 12 : index
    %c0_73 = arith.constant 0 : index
    %79 = vector.load %arg11[%c12, %c0_73] : memref<42x64xf32, #tpu.memory_space<vmem>>, vector<1x64xf32>
    %80 = arith.maximumf %78, %79 : vector<1x64xf32>
    %81 = arith.maximumf %77, %80 : vector<1x64xf32>
    %82 = arith.addf %81, %45 : vector<1x64xf32>
    %cst_74 = arith.constant 0.000000e+00 : f32
    %83 = vector.broadcast %cst_74 : f32 to vector<1x64xf32>
    %84 = arith.maximumf %82, %83 : vector<1x64xf32>
    %c2_75 = arith.constant 2 : index
    %c0_76 = arith.constant 0 : index
    %c0_77 = arith.constant 0 : index
    %85 = vector.load %arg6[%c2_75, %c0_76, %c0_77] : memref<9x64x4xf32, #tpu.memory_space<vmem>>, vector<1x64x4xf32>
    %86 = vector.shape_cast %85 : vector<1x64x4xf32> to vector<64x4xf32>
    %cst_78 = arith.constant dense<0.000000e+00> : vector<1x4xf32>
    %87 = tpu.matmul %84, %86, %cst_78 {dimension_numbers = #tpu.dot_dimension_numbers<[1], [0], [0], [1], [0, 0, 1, 1], [], []>} : vector<1x64xf32>, vector<64x4xf32>, vector<1x4xf32> -> vector<1x4xf32>
    %88 = arith.addf %74, %87 : vector<1x4xf32>
    %c14 = arith.constant 14 : index
    %c0_79 = arith.constant 0 : index
    %89 = vector.load %arg11[%c14, %c0_79] : memref<42x64xf32, #tpu.memory_space<vmem>>, vector<1x64xf32>
    %c15_80 = arith.constant 15 : index
    %c0_81 = arith.constant 0 : index
    %90 = vector.load %arg11[%c15_80, %c0_81] : memref<42x64xf32, #tpu.memory_space<vmem>>, vector<1x64xf32>
    %91 = arith.maximumf %89, %90 : vector<1x64xf32>
    %c21 = arith.constant 21 : index
    %c0_82 = arith.constant 0 : index
    %92 = vector.load %arg11[%c21, %c0_82] : memref<42x64xf32, #tpu.memory_space<vmem>>, vector<1x64xf32>
    %c22_83 = arith.constant 22 : index
    %c0_84 = arith.constant 0 : index
    %93 = vector.load %arg11[%c22_83, %c0_84] : memref<42x64xf32, #tpu.memory_space<vmem>>, vector<1x64xf32>
    %94 = arith.maximumf %92, %93 : vector<1x64xf32>
    %95 = arith.maximumf %91, %94 : vector<1x64xf32>
    %96 = arith.addf %95, %45 : vector<1x64xf32>
    %cst_85 = arith.constant 0.000000e+00 : f32
    %97 = vector.broadcast %cst_85 : f32 to vector<1x64xf32>
    %98 = arith.maximumf %96, %97 : vector<1x64xf32>
    %c3_86 = arith.constant 3 : index
    %c0_87 = arith.constant 0 : index
    %c0_88 = arith.constant 0 : index
    %99 = vector.load %arg6[%c3_86, %c0_87, %c0_88] : memref<9x64x4xf32, #tpu.memory_space<vmem>>, vector<1x64x4xf32>
    %100 = vector.shape_cast %99 : vector<1x64x4xf32> to vector<64x4xf32>
    %cst_89 = arith.constant dense<0.000000e+00> : vector<1x4xf32>
    %101 = tpu.matmul %98, %100, %cst_89 {dimension_numbers = #tpu.dot_dimension_numbers<[1], [0], [0], [1], [0, 0, 1, 1], [], []>} : vector<1x64xf32>, vector<64x4xf32>, vector<1x4xf32> -> vector<1x4xf32>
    %102 = arith.addf %88, %101 : vector<1x4xf32>
    %c16_90 = arith.constant 16 : index
    %c0_91 = arith.constant 0 : index
    %103 = vector.load %arg11[%c16_90, %c0_91] : memref<42x64xf32, #tpu.memory_space<vmem>>, vector<1x64xf32>
    %c17 = arith.constant 17 : index
    %c0_92 = arith.constant 0 : index
    %104 = vector.load %arg11[%c17, %c0_92] : memref<42x64xf32, #tpu.memory_space<vmem>>, vector<1x64xf32>
    %105 = arith.maximumf %103, %104 : vector<1x64xf32>
    %c23 = arith.constant 23 : index
    %c0_93 = arith.constant 0 : index
    %106 = vector.load %arg11[%c23, %c0_93] : memref<42x64xf32, #tpu.memory_space<vmem>>, vector<1x64xf32>
    %c24_94 = arith.constant 24 : index
    %c0_95 = arith.constant 0 : index
    %107 = vector.load %arg11[%c24_94, %c0_95] : memref<42x64xf32, #tpu.memory_space<vmem>>, vector<1x64xf32>
    %108 = arith.maximumf %106, %107 : vector<1x64xf32>
    %109 = arith.maximumf %105, %108 : vector<1x64xf32>
    %110 = arith.addf %109, %45 : vector<1x64xf32>
    %cst_96 = arith.constant 0.000000e+00 : f32
    %111 = vector.broadcast %cst_96 : f32 to vector<1x64xf32>
    %112 = arith.maximumf %110, %111 : vector<1x64xf32>
    %c4_97 = arith.constant 4 : index
    %c0_98 = arith.constant 0 : index
    %c0_99 = arith.constant 0 : index
    %113 = vector.load %arg6[%c4_97, %c0_98, %c0_99] : memref<9x64x4xf32, #tpu.memory_space<vmem>>, vector<1x64x4xf32>
    %114 = vector.shape_cast %113 : vector<1x64x4xf32> to vector<64x4xf32>
    %cst_100 = arith.constant dense<0.000000e+00> : vector<1x4xf32>
    %115 = tpu.matmul %112, %114, %cst_100 {dimension_numbers = #tpu.dot_dimension_numbers<[1], [0], [0], [1], [0, 0, 1, 1], [], []>} : vector<1x64xf32>, vector<64x4xf32>, vector<1x4xf32> -> vector<1x4xf32>
    %116 = arith.addf %102, %115 : vector<1x4xf32>
    %c18 = arith.constant 18 : index
    %c0_101 = arith.constant 0 : index
    %117 = vector.load %arg11[%c18, %c0_101] : memref<42x64xf32, #tpu.memory_space<vmem>>, vector<1x64xf32>
    %c19 = arith.constant 19 : index
    %c0_102 = arith.constant 0 : index
    %118 = vector.load %arg11[%c19, %c0_102] : memref<42x64xf32, #tpu.memory_space<vmem>>, vector<1x64xf32>
    %119 = arith.maximumf %117, %118 : vector<1x64xf32>
    %c25 = arith.constant 25 : index
    %c0_103 = arith.constant 0 : index
    %120 = vector.load %arg11[%c25, %c0_103] : memref<42x64xf32, #tpu.memory_space<vmem>>, vector<1x64xf32>
    %c26 = arith.constant 26 : index
    %c0_104 = arith.constant 0 : index
    %121 = vector.load %arg11[%c26, %c0_104] : memref<42x64xf32, #tpu.memory_space<vmem>>, vector<1x64xf32>
    %122 = arith.maximumf %120, %121 : vector<1x64xf32>
    %123 = arith.maximumf %119, %122 : vector<1x64xf32>
    %124 = arith.addf %123, %45 : vector<1x64xf32>
    %cst_105 = arith.constant 0.000000e+00 : f32
    %125 = vector.broadcast %cst_105 : f32 to vector<1x64xf32>
    %126 = arith.maximumf %124, %125 : vector<1x64xf32>
    %c5_106 = arith.constant 5 : index
    %c0_107 = arith.constant 0 : index
    %c0_108 = arith.constant 0 : index
    %127 = vector.load %arg6[%c5_106, %c0_107, %c0_108] : memref<9x64x4xf32, #tpu.memory_space<vmem>>, vector<1x64x4xf32>
    %128 = vector.shape_cast %127 : vector<1x64x4xf32> to vector<64x4xf32>
    %cst_109 = arith.constant dense<0.000000e+00> : vector<1x4xf32>
    %129 = tpu.matmul %126, %128, %cst_109 {dimension_numbers = #tpu.dot_dimension_numbers<[1], [0], [0], [1], [0, 0, 1, 1], [], []>} : vector<1x64xf32>, vector<64x4xf32>, vector<1x4xf32> -> vector<1x4xf32>
    %130 = arith.addf %116, %129 : vector<1x4xf32>
    %c28 = arith.constant 28 : index
    %c0_110 = arith.constant 0 : index
    %131 = vector.load %arg11[%c28, %c0_110] : memref<42x64xf32, #tpu.memory_space<vmem>>, vector<1x64xf32>
    %c29_111 = arith.constant 29 : index
    %c0_112 = arith.constant 0 : index
    %132 = vector.load %arg11[%c29_111, %c0_112] : memref<42x64xf32, #tpu.memory_space<vmem>>, vector<1x64xf32>
    %133 = arith.maximumf %131, %132 : vector<1x64xf32>
    %c35 = arith.constant 35 : index
    %c0_113 = arith.constant 0 : index
    %134 = vector.load %arg11[%c35, %c0_113] : memref<42x64xf32, #tpu.memory_space<vmem>>, vector<1x64xf32>
    %c36_114 = arith.constant 36 : index
    %c0_115 = arith.constant 0 : index
    %135 = vector.load %arg11[%c36_114, %c0_115] : memref<42x64xf32, #tpu.memory_space<vmem>>, vector<1x64xf32>
    %136 = arith.maximumf %134, %135 : vector<1x64xf32>
    %137 = arith.maximumf %133, %136 : vector<1x64xf32>
    %138 = arith.addf %137, %45 : vector<1x64xf32>
    %cst_116 = arith.constant 0.000000e+00 : f32
    %139 = vector.broadcast %cst_116 : f32 to vector<1x64xf32>
    %140 = arith.maximumf %138, %139 : vector<1x64xf32>
    %c6 = arith.constant 6 : index
    %c0_117 = arith.constant 0 : index
    %c0_118 = arith.constant 0 : index
    %141 = vector.load %arg6[%c6, %c0_117, %c0_118] : memref<9x64x4xf32, #tpu.memory_space<vmem>>, vector<1x64x4xf32>
    %142 = vector.shape_cast %141 : vector<1x64x4xf32> to vector<64x4xf32>
    %cst_119 = arith.constant dense<0.000000e+00> : vector<1x4xf32>
    %143 = tpu.matmul %140, %142, %cst_119 {dimension_numbers = #tpu.dot_dimension_numbers<[1], [0], [0], [1], [0, 0, 1, 1], [], []>} : vector<1x64xf32>, vector<64x4xf32>, vector<1x4xf32> -> vector<1x4xf32>
    %144 = arith.addf %130, %143 : vector<1x4xf32>
    %c30 = arith.constant 30 : index
    %c0_120 = arith.constant 0 : index
    %145 = vector.load %arg11[%c30, %c0_120] : memref<42x64xf32, #tpu.memory_space<vmem>>, vector<1x64xf32>
    %c31 = arith.constant 31 : index
    %c0_121 = arith.constant 0 : index
    %146 = vector.load %arg11[%c31, %c0_121] : memref<42x64xf32, #tpu.memory_space<vmem>>, vector<1x64xf32>
    %147 = arith.maximumf %145, %146 : vector<1x64xf32>
    %c37 = arith.constant 37 : index
    %c0_122 = arith.constant 0 : index
    %148 = vector.load %arg11[%c37, %c0_122] : memref<42x64xf32, #tpu.memory_space<vmem>>, vector<1x64xf32>
    %c38 = arith.constant 38 : index
    %c0_123 = arith.constant 0 : index
    %149 = vector.load %arg11[%c38, %c0_123] : memref<42x64xf32, #tpu.memory_space<vmem>>, vector<1x64xf32>
    %150 = arith.maximumf %148, %149 : vector<1x64xf32>
    %151 = arith.maximumf %147, %150 : vector<1x64xf32>
    %152 = arith.addf %151, %45 : vector<1x64xf32>
    %cst_124 = arith.constant 0.000000e+00 : f32
    %153 = vector.broadcast %cst_124 : f32 to vector<1x64xf32>
    %154 = arith.maximumf %152, %153 : vector<1x64xf32>
    %c7_125 = arith.constant 7 : index
    %c0_126 = arith.constant 0 : index
    %c0_127 = arith.constant 0 : index
    %155 = vector.load %arg6[%c7_125, %c0_126, %c0_127] : memref<9x64x4xf32, #tpu.memory_space<vmem>>, vector<1x64x4xf32>
    %156 = vector.shape_cast %155 : vector<1x64x4xf32> to vector<64x4xf32>
    %cst_128 = arith.constant dense<0.000000e+00> : vector<1x4xf32>
    %157 = tpu.matmul %154, %156, %cst_128 {dimension_numbers = #tpu.dot_dimension_numbers<[1], [0], [0], [1], [0, 0, 1, 1], [], []>} : vector<1x64xf32>, vector<64x4xf32>, vector<1x4xf32> -> vector<1x4xf32>
    %158 = arith.addf %144, %157 : vector<1x4xf32>
    %c32 = arith.constant 32 : index
    %c0_129 = arith.constant 0 : index
    %159 = vector.load %arg11[%c32, %c0_129] : memref<42x64xf32, #tpu.memory_space<vmem>>, vector<1x64xf32>
    %c33 = arith.constant 33 : index
    %c0_130 = arith.constant 0 : index
    %160 = vector.load %arg11[%c33, %c0_130] : memref<42x64xf32, #tpu.memory_space<vmem>>, vector<1x64xf32>
    %161 = arith.maximumf %159, %160 : vector<1x64xf32>
    %c39 = arith.constant 39 : index
    %c0_131 = arith.constant 0 : index
    %162 = vector.load %arg11[%c39, %c0_131] : memref<42x64xf32, #tpu.memory_space<vmem>>, vector<1x64xf32>
    %c40 = arith.constant 40 : index
    %c0_132 = arith.constant 0 : index
    %163 = vector.load %arg11[%c40, %c0_132] : memref<42x64xf32, #tpu.memory_space<vmem>>, vector<1x64xf32>
    %164 = arith.maximumf %162, %163 : vector<1x64xf32>
    %165 = arith.maximumf %161, %164 : vector<1x64xf32>
    %166 = arith.addf %165, %45 : vector<1x64xf32>
    %cst_133 = arith.constant 0.000000e+00 : f32
    %167 = vector.broadcast %cst_133 : f32 to vector<1x64xf32>
    %168 = arith.maximumf %166, %167 : vector<1x64xf32>
    %c8_134 = arith.constant 8 : index
    %c0_135 = arith.constant 0 : index
    %c0_136 = arith.constant 0 : index
    %169 = vector.load %arg6[%c8_134, %c0_135, %c0_136] : memref<9x64x4xf32, #tpu.memory_space<vmem>>, vector<1x64x4xf32>
    %170 = vector.shape_cast %169 : vector<1x64x4xf32> to vector<64x4xf32>
    %cst_137 = arith.constant dense<0.000000e+00> : vector<1x4xf32>
    %171 = tpu.matmul %168, %170, %cst_137 {dimension_numbers = #tpu.dot_dimension_numbers<[1], [0], [0], [1], [0, 0, 1, 1], [], []>} : vector<1x64xf32>, vector<64x4xf32>, vector<1x4xf32> -> vector<1x4xf32>
    %172 = arith.addf %158, %171 : vector<1x4xf32>
    %cst_138 = arith.constant dense<0xFF800000> : vector<1xf32>
    %173 = vector.multi_reduction <maximumf>, %172, %cst_138 [1] : vector<1x4xf32> to vector<1xf32>
    %174 = vector.shape_cast %173 : vector<1xf32> to vector<1x1xf32>
    %175 = vector.broadcast %174 : vector<1x1xf32> to vector<1x4xf32>
    %176 = arith.subf %172, %175 : vector<1x4xf32>
    %177 = math.exp %176 : vector<1x4xf32>
    %cst_139 = arith.constant dense<0.000000e+00> : vector<1xf32>
    %178 = vector.multi_reduction <add>, %177, %cst_139 [1] : vector<1x4xf32> to vector<1xf32>
    %179 = vector.shape_cast %178 : vector<1xf32> to vector<1x1xf32>
    %180 = math.log %179 : vector<1x1xf32>
    %181 = vector.broadcast %180 : vector<1x1xf32> to vector<1x4xf32>
    %182 = arith.subf %176, %181 : vector<1x4xf32>
    %c0_140 = arith.constant 0 : index
    %c0_141 = arith.constant 0 : index
    %c0_142 = arith.constant 0 : index
    %183 = vector.load %arg8[%c0_140, %c0_141, %c0_142] : memref<1x1x4xf32, #tpu.memory_space<vmem>>, vector<1x1x4xf32>
    %184 = vector.shape_cast %183 : vector<1x1x4xf32> to vector<1x4xf32>
    %185 = vector.shape_cast %182 : vector<1x4xf32> to vector<1x1x4xf32>
    tpu.vector_store %arg8[%c0_140, %c0_141, %c0_142], %185 {strides = array<i32>} : memref<1x1x4xf32, #tpu.memory_space<vmem>>, vector<1x1x4xf32>,
    return
  }
  func.func @transform_0(%arg0: i32) -> (i32, i32, i32) {
    %c0_i32 = arith.constant 0 : i32
    %c0_i32_0 = arith.constant 0 : i32
    %c0_i32_1 = arith.constant 0 : i32
    return %arg0, %c0_i32, %c0_i32_0 : i32, i32, i32
  }
  func.func @transform_1(%arg0: i32) -> (i32, i32) {
    %c0_i32 = arith.constant 0 : i32
    %c0_i32_0 = arith.constant 0 : i32
    %c0_i32_1 = arith.constant 0 : i32
    return %c0_i32, %c0_i32_0 : i32, i32
  }
  func.func @transform_2(%arg0: i32) -> (i32, i32) {
    %c0_i32 = arith.constant 0 : i32
    %c0_i32_0 = arith.constant 0 : i32
    %c0_i32_1 = arith.constant 0 : i32
    return %c0_i32, %c0_i32_0 : i32, i32
  }
  func.func @transform_3(%arg0: i32) -> (i32, i32) {
    %c0_i32 = arith.constant 0 : i32
    %c0_i32_0 = arith.constant 0 : i32
    %c0_i32_1 = arith.constant 0 : i32
    return %c0_i32, %c0_i32_0 : i32, i32
  }
  func.func @transform_4(%arg0: i32) -> (i32, i32) {
    %c0_i32 = arith.constant 0 : i32
    %c0_i32_0 = arith.constant 0 : i32
    %c0_i32_1 = arith.constant 0 : i32
    return %c0_i32, %c0_i32_0 : i32, i32
  }
  func.func @transform_5(%arg0: i32) -> (i32, i32, i32) {
    %c0_i32 = arith.constant 0 : i32
    %c0_i32_0 = arith.constant 0 : i32
    %c0_i32_1 = arith.constant 0 : i32
    %c0_i32_2 = arith.constant 0 : i32
    return %c0_i32, %c0_i32_0, %c0_i32_1 : i32, i32, i32
  }
  func.func @transform_6(%arg0: i32) -> (i32, i32) {
    %c0_i32 = arith.constant 0 : i32
    %c0_i32_0 = arith.constant 0 : i32
    %c0_i32_1 = arith.constant 0 : i32
    return %c0_i32, %c0_i32_0 : i32, i32
  }
  func.func @transform_7(%arg0: i32) -> (i32, i32, i32) {
    %c0_i32 = arith.constant 0 : i32
    %c0_i32_0 = arith.constant 0 : i32
    %c0_i32_1 = arith.constant 0 : i32
    return %arg0, %c0_i32, %c0_i32_0 : i32, i32, i32
  }
}

</mosaic_0001>

<llo_original>
// kernel: cnn_forward.1
$region0: #{cnn_forward.1}
  #allocation0 [shape = 'u32[]', space=smem, size = 0x4, offset = 0x4, fixed_abs, tag = 'smem constant byte address 0x4 - core index']
  #allocation1 [shape = 'u32[144,128]{1,0:T(1,128)}', space=vmem, size = 0x12000, scoped, tag = 'internal scratch']
  #allocation2 [shape = 'f32[32,8]{1,0:T(8,128)}', space=vmem, size = 0x4000, scoped, tag = 'scratch operand']
  #allocation3 [shape = 'f32[56,8]{1,0:T(8,128)}', space=vmem, size = 0x7000, scoped, tag = 'scratch operand']
  #allocation4 [shape = 'f32[42,64]{1,0:T(8,128)}', space=vmem, size = 0x6000, scoped, tag = 'scratch operand']
  %s0 = inlined_call_operand.vmem [shape: f32[2,128,4], index: 0, kind: input, shape index: {}]
  %s1 = inlined_call_operand.vmem [shape: f32[4,8], index: 1, kind: input, shape index: {}]
  %s2 = inlined_call_operand.vmem [shape: f32[1,8], index: 2, kind: input, shape index: {}]
  %s3 = inlined_call_operand.vmem [shape: f32[32,64], index: 3, kind: input, shape index: {}]
  %s4 = inlined_call_operand.vmem [shape: f32[1,64], index: 4, kind: input, shape index: {}]
  %s5 = inlined_call_operand.vmem [shape: f32[9,64,4], index: 5, kind: input, shape index: {}]
  %s6 = inlined_call_operand.vmem [shape: f32[1,4], index: 6, kind: input, shape index: {}]
  %s7 = inlined_call_operand.hbm [shape: f32[2,1,4], index: 7, kind: output, shape index: {}]
  %s8 = sld [smem:[#allocation0]]
  $region61: #{cnn_forward.1} parent=0
    _
  %s10 = ssub.s32 1, %s8
  %s11 = scalar_select 0, %s10, %s8
  $region1: #{cnn_forward.1} parent=0
    #allocation5 [shape = 'u8[1024]{0}', space=vmem, size = 0x400, scoped, tag = 'output window, operand 0']
    #allocation6 [shape = 's32[2]{0}', space=sflag, size = 0x8, scoped, tag = 'scoped memory for cnn_forward.1']
    %12 = vsyncpa [#allocation6], 0
    %s13 = scalar_lea.sflag [#allocation6], 1
    %14 = vsyncpa %s13, 0
    loop: start=0, step=1, limit=4
    $region2: #{cnn_forward.1} parent=1 // loop_pre_header
      _
    $region3: #{cnn_forward.1} parent=1 // loop_header
      %s16 = sphi 0, %s20
      %p17 = scmp.ge.s32.totalorder %s16, 4
      %s26 = sphi 0, %s28
      %s29 = sphi 0, %s26
      %s30 = sphi 0, %s29
      %s46 = sphi 0, %s30
      %s50 = sphi 0, %s50
      %s52 = sphi 0, %s50
      %s53 = sphi 0, %s52
      %s67 = sphi 0, %s53
      %s71 = sphi 0, %s71
      %s73 = sphi 0, %s71
      %s74 = sphi 0, %s73
      %s88 = sphi 0, %s74
      %s92 = sphi 0, %s92
      %s94 = sphi 0, %s92
      %s95 = sphi 0, %s94
      %s109 = sphi 0, %s95
      %s113 = sphi 0, %s113
      %s115 = sphi 0, %s113
      %s116 = sphi 0, %s115
      %s130 = sphi 0, %s116
      %s134 = sphi 0, %s134
      %s136 = sphi 0, %s134
      %s137 = sphi 0, %s136
      %s151 = sphi 0, %s137
      %s155 = sphi 0, %s155
      %s157 = sphi 0, %s155
      %s158 = sphi 0, %s157
      %s172 = sphi 0, %s158
      %s178 = sphi 0, %s180
      %s181 = sphi 0, %s178
      %s182 = sphi 0, %s181
      %s198 = sphi 0, %s182
    $region4: #{cnn_forward.1} parent=1 // loop_header_branch
      %19 = sbr.rel (%p17) target = $region8
    $region5: #{cnn_forward.1} parent=1 // loop_body
      %s21 = ssub.s32 %s16, 1
      %s22 = ssub.s32 %s16, 2
      %s23 = sadd.s32 %s16, 1
      %s24 = ssub.s32 %s16, %s23
      %p25 = scmp.eq.s32.totalorder %s24, 0
      %s27 = sadd.s32 %s26, 1
      %s28 = scalar_select %p25, %s26, %s27
      %p31 = pneg %p25
      %p32 = scmp.eq.s32.totalorder %s16, 1
      %p33 = por %p31, %p32
      %p34 = scmp.ne.s32.totalorder %s26, %s29
      %p35 = scmp.eq.s32.totalorder %s16, 0
      %p36 = por %p34, %p35
      %p37 = scmp.ne.s32.totalorder %s26, %s29
      %p38 = scmp.eq.s32.totalorder %s21, 1
      %p39 = por %p37, %p38
      %p40 = scmp.ne.s32.totalorder %s29, %s30
      %p41 = scmp.eq.s32.totalorder %s21, 0
      %p42 = por %p40, %p41
      %p43 = scmp.ne.s32.totalorder %s29, %s30
      %p44 = scmp.eq.s32.totalorder %s22, 1
      %p45 = por %p43, %p44
      %p47 = scmp.ne.s32.totalorder %s30, %s46
      %p48 = scmp.eq.s32.totalorder %s22, 0
      %p49 = por %p47, %p48
      %s51 = sadd.s32 %s50, 1
      %p54 = scmp.eq.s32.totalorder %s16, 1
      %p55 = scmp.ne.s32.totalorder %s50, %s52
      %p56 = scmp.eq.s32.totalorder %s16, 0
      %p57 = por %p55, %p56
      %p58 = scmp.ne.s32.totalorder %s50, %s52
      %p59 = scmp.eq.s32.totalorder %s21, 1
      %p60 = por %p58, %p59
      %p61 = scmp.ne.s32.totalorder %s52, %s53
      %p62 = scmp.eq.s32.totalorder %s21, 0
      %p63 = por %p61, %p62
      %p64 = scmp.ne.s32.totalorder %s52, %s53
      %p65 = scmp.eq.s32.totalorder %s22, 1
      %p66 = por %p64, %p65
      %p68 = scmp.ne.s32.totalorder %s53, %s67
      %p69 = scmp.eq.s32.totalorder %s22, 0
      %p70 = por %p68, %p69
      %s72 = sadd.s32 %s71, 1
      %p75 = scmp.eq.s32.totalorder %s16, 1
      %p76 = scmp.ne.s32.totalorder %s71, %s73
      %p77 = scmp.eq.s32.totalorder %s16, 0
      %p78 = por %p76, %p77
      %p79 = scmp.ne.s32.totalorder %s71, %s73
      %p80 = scmp.eq.s32.totalorder %s21, 1
      %p81 = por %p79, %p80
      %p82 = scmp.ne.s32.totalorder %s73, %s74
      %p83 = scmp.eq.s32.totalorder %s21, 0
      %p84 = por %p82, %p83
      %p85 = scmp.ne.s32.totalorder %s73, %s74
      %p86 = scmp.eq.s32.totalorder %s22, 1
      %p87 = por %p85, %p86
      %p89 = scmp.ne.s32.totalorder %s74, %s88
      %p90 = scmp.eq.s32.totalorder %s22, 0
      %p91 = por %p89, %p90
      %s93 = sadd.s32 %s92, 1
      %p96 = scmp.eq.s32.totalorder %s16, 1
      %p97 = scmp.ne.s32.totalorder %s92, %s94
      %p98 = scmp.eq.s32.totalorder %s16, 0
      %p99 = por %p97, %p98
      %p100 = scmp.ne.s32.totalorder %s92, %s94
      %p101 = scmp.eq.s32.totalorder %s21, 1
      %p102 = por %p100, %p101
      %p103 = scmp.ne.s32.totalorder %s94, %s95
      %p104 = scmp.eq.s32.totalorder %s21, 0
      %p105 = por %p103, %p104
      %p106 = scmp.ne.s32.totalorder %s94, %s95
      %p107 = scmp.eq.s32.totalorder %s22, 1
      %p108 = por %p106, %p107
      %p110 = scmp.ne.s32.totalorder %s95, %s109
      %p111 = scmp.eq.s32.totalorder %s22, 0
      %p112 = por %p110, %p111
      %s114 = sadd.s32 %s113, 1
      %p117 = scmp.eq.s32.totalorder %s16, 1
      %p118 = scmp.ne.s32.totalorder %s113, %s115
      %p119 = scmp.eq.s32.totalorder %s16, 0
      %p120 = por %p118, %p119
      %p121 = scmp.ne.s32.totalorder %s113, %s115
      %p122 = scmp.eq.s32.totalorder %s21, 1
      %p123 = por %p121, %p122
      %p124 = scmp.ne.s32.totalorder %s115, %s116
      %p125 = scmp.eq.s32.totalorder %s21, 0
      %p126 = por %p124, %p125
      %p127 = scmp.ne.s32.totalorder %s115, %s116
      %p128 = scmp.eq.s32.totalorder %s22, 1
      %p129 = por %p127, %p128
      %p131 = scmp.ne.s32.totalorder %s116, %s130
      %p132 = scmp.eq.s32.totalorder %s22, 0
      %p133 = por %p131, %p132
      %s135 = sadd.s32 %s134, 1
      %p138 = scmp.eq.s32.totalorder %s16, 1
      %p139 = scmp.ne.s32.totalorder %s134, %s136
      %p140 = scmp.eq.s32.totalorder %s16, 0
      %p141 = por %p139, %p140
      %p142 = scmp.ne.s32.totalorder %s134, %s136
      %p143 = scmp.eq.s32.totalorder %s21, 1
      %p144 = por %p142, %p143
      %p145 = scmp.ne.s32.totalorder %s136, %s137
      %p146 = scmp.eq.s32.totalorder %s21, 0
      %p147 = por %p145, %p146
      %p148 = scmp.ne.s32.totalorder %s136, %s137
      %p149 = scmp.eq.s32.totalorder %s22, 1
      %p150 = por %p148, %p149
      %p152 = scmp.ne.s32.totalorder %s137, %s151
      %p153 = scmp.eq.s32.totalorder %s22, 0
      %p154 = por %p152, %p153
      %s156 = sadd.s32 %s155, 1
      %p159 = scmp.eq.s32.totalorder %s16, 1
      %p160 = scmp.ne.s32.totalorder %s155, %s157
      %p161 = scmp.eq.s32.totalorder %s16, 0
      %p162 = por %p160, %p161
      %p163 = scmp.ne.s32.totalorder %s155, %s157
      %p164 = scmp.eq.s32.totalorder %s21, 1
      %p165 = por %p163, %p164
      %p166 = scmp.ne.s32.totalorder %s157, %s158
      %p167 = scmp.eq.s32.totalorder %s21, 0
      %p168 = por %p166, %p167
      %p169 = scmp.ne.s32.totalorder %s157, %s158
      %p170 = scmp.eq.s32.totalorder %s22, 1
      %p171 = por %p169, %p170
      %p173 = scmp.ne.s32.totalorder %s158, %s172
      %p174 = scmp.eq.s32.totalorder %s22, 0
      %p175 = por %p173, %p174
      %s176 = ssub.s32 %s16, %s23
      %p177 = scmp.eq.s32.totalorder %s176, 0
      %s179 = sadd.s32 %s178, 1
      %s180 = scalar_select %p177, %s178, %s179
      %p183 = pneg %p177
      %p184 = scmp.eq.s32.totalorder %s16, 1
      %p185 = por %p183, %p184
      %p186 = scmp.ne.s32.totalorder %s178, %s181
      %p187 = scmp.eq.s32.totalorder %s16, 0
      %p188 = por %p186, %p187
      %p189 = scmp.ne.s32.totalorder %s178, %s181
      %p190 = scmp.eq.s32.totalorder %s21, 1
      %p191 = por %p189, %p190
      %p192 = scmp.ne.s32.totalorder %s181, %s182
      %p193 = scmp.eq.s32.totalorder %s21, 0
      %p194 = por %p192, %p193
      %p195 = scmp.ne.s32.totalorder %s181, %s182
      %p196 = scmp.eq.s32.totalorder %s22, 1
      %p197 = por %p195, %p196
      %p199 = scmp.ne.s32.totalorder %s182, %s198
      %p200 = scmp.eq.s32.totalorder %s22, 0
      %p201 = por %p199, %p200
      %p202 = scmp.le.s32.totalorder 1, %s16
      %p203 = scmp.lt.s32.totalorder %s16, 3
      %p204 = pnand %p202, %p203
      %p205 = pneg %p204
      // Predicated region
      $region9: #{cnn_forward.1} parent=5 // pred_check
        _
      $region10: #{cnn_forward.1} parent=5 // pred_check_branch
        %207 = sbr.rel (%p204) target = $region12
      $region11: #{cnn_forward.1} parent=5 // pred_region
        %s208 = ssub.s32 %s16, 1
        // Predicated region
        $region13: #{cnn_forward.1} parent=11 // pred_check
          %p209 = pneg %p63
        $region14: #{cnn_forward.1} parent=11 // pred_check_branch
          %211 = sbr.rel (%p209) target = $region16
        $region15: #{cnn_forward.1} parent=11 // pred_region
          _
        $region16: #{cnn_forward.1} parent=11 // pred_fallthru
          _
        // Predicated region
        $region17: #{cnn_forward.1} parent=11 // pred_check
          %p212 = pneg %p84
        $region18: #{cnn_forward.1} parent=11 // pred_check_branch
          %214 = sbr.rel (%p212) target = $region20
        $region19: #{cnn_forward.1} parent=11 // pred_region
          _
        $region20: #{cnn_forward.1} parent=11 // pred_fallthru
          _
        // Predicated region
        $region21: #{cnn_forward.1} parent=11 // pred_check
          %p215 = pneg %p105
        $region22: #{cnn_forward.1} parent=11 // pred_check_branch
          %217 = sbr.rel (%p215) target = $region24
        $region23: #{cnn_forward.1} parent=11 // pred_region
          _
        $region24: #{cnn_forward.1} parent=11 // pred_fallthru
          _
        // Predicated region
        $region25: #{cnn_forward.1} parent=11 // pred_check
          %p218 = pneg %p126
        $region26: #{cnn_forward.1} parent=11 // pred_check_branch
          %220 = sbr.rel (%p218) target = $region28
        $region27: #{cnn_forward.1} parent=11 // pred_region
          _
        $region28: #{cnn_forward.1} parent=11 // pred_fallthru
          _
        // Predicated region
        $region29: #{cnn_forward.1} parent=11 // pred_check
          %p221 = pneg %p147
        $region30: #{cnn_forward.1} parent=11 // pred_check_branch
          %223 = sbr.rel (%p221) target = $region32
        $region31: #{cnn_forward.1} parent=11 // pred_region
          _
        $region32: #{cnn_forward.1} parent=11 // pred_fallthru
          _
        // Predicated region
        $region33: #{cnn_forward.1} parent=11 // pred_check
          %p224 = pneg %p168
        $region34: #{cnn_forward.1} parent=11 // pred_check_branch
          %226 = sbr.rel (%p224) target = $region36
        $region35: #{cnn_forward.1} parent=11 // pred_region
          _
        $region36: #{cnn_forward.1} parent=11 // pred_fallthru
          _
      $region12: #{cnn_forward.1} parent=5 // pred_fallthru
        _
      %p227 = scmp.lt.s32.totalorder %s16, 2
      // Predicated region
      $region37: #{cnn_forward.1} parent=5 // pred_check
        %p228 = pneg %p227
      $region38: #{cnn_forward.1} parent=5 // pred_check_branch
        %230 = sbr.rel (%p228) target = $region40
      $region39: #{cnn_forward.1} parent=5 // pred_region
        // Predicated region
        $region41: #{cnn_forward.1} parent=39 // pred_check
          %p231 = pneg %p36
        $region42: #{cnn_forward.1} parent=39 // pred_check_branch
          %233 = sbr.rel (%p231) target = $region44
        $region43: #{cnn_forward.1} parent=39 // pred_region
          %p234 = scmp.lt.s32.totalorder %s16, 1
          %s235 = scalar_select %p234, %s16, 1
          %s236 = smul.addr %s235, 16
          %s237 = smul.addr %s236, 8
          %s238 = scalar_lea.vmem %s0, %s237
        $region44: #{cnn_forward.1} parent=39 // pred_fallthru
          _
      $region40: #{cnn_forward.1} parent=5 // pred_fallthru
        _
      %p239 = scmp.le.s32.totalorder 1, %s16
      %p240 = scmp.lt.s32.totalorder %s16, 3
      %p241 = pnand %p239, %p240
      %p242 = pneg %p241
      // Predicated region
      $region45: #{cnn_forward.1} parent=5 // pred_check
        _
      $region46: #{cnn_forward.1} parent=5 // pred_check_branch
        %244 = sbr.rel (%p241) target = $region48
      $region47: #{cnn_forward.1} parent=5 // pred_region
        %s245 = ssub.s32 %s16, 1
        %p246 = scmp.lt.s32.totalorder %s21, 1
        %s247 = scalar_select %p246, %s21, 1
        %s248 = smul.addr %s247, 16
        %s249 = smul.addr %s248, 8
        %s250 = scalar_lea.vmem %s0, %s249
        %p251 = pneg %p42
        %p252 = pneg %p39
        %p253 = pneg %p63
        %p254 = pneg %p60
        %p255 = pneg %p84
        %p256 = pneg %p81
        %p257 = pneg %p105
        %p258 = pneg %p102
        %p259 = pneg %p126
        %p260 = pneg %p123
        %p261 = pneg %p147
        %p262 = pneg %p144
        %p263 = pneg %p168
        %p264 = pneg %p165
        %p265 = pneg %p194
        %p266 = pneg %p191
        %s267 = sand.u32 %s181, 1
        %s268 = scalar_lea.sflag [#allocation6], %s267
        %s269 = sand.u32 %s181, 1
        %s270 = scalar_lea.vmem [#allocation5], %s269
        %p271 = scmp.lt.s32.totalorder %s21, 1
        %s272 = scalar_select %p271, %s21, 1
        %s273 = smul.addr %s272, 16
        %s274 = smul.addr %s273, 8
        %s275 = scalar_lea.vmem %s0, %s274
        %v276 = vld [vmem:[%s275] sm:$0xff]
        %v277 = vld [vmem:[%s275 + $0x8] sm:$0xff]
        %v278 = vld [vmem:[%s275 + $0x10] sm:$0xff]
        %v279 = vld [vmem:[%s275 + $0x18] sm:$0xff]
        %v280 = vld [vmem:[%s275 + $0x20] sm:$0xff]
        %v281 = vld [vmem:[%s275 + $0x28] sm:$0xff]
        %v282 = vld [vmem:[%s275 + $0x30] sm:$0xff]
        %v283 = vld [vmem:[%s275 + $0x38] sm:$0xff]
        %v284 = vld [vmem:[%s275 + $0x40] sm:$0xff]
        %v285 = vld [vmem:[%s275 + $0x48] sm:$0xff]
        %v286 = vld [vmem:[%s275 + $0x50] sm:$0xff]
        %v287 = vld [vmem:[%s275 + $0x58] sm:$0xff]
        %v288 = vld [vmem:[%s275 + $0x60] sm:$0xff]
        %v289 = vld [vmem:[%s275 + $0x68] sm:$0xff]
        %v290 = vld [vmem:[%s275 + $0x70] sm:$0xff]
        %v291 = vld [vmem:[%s275 + $0x78] sm:$0xff]
        %v292 = vld [vmem:[%s1] sm:$0xf]
        %vm293 = vcmask 31744
        %v295 = vsel %vm293, %v276, 0
        %v298 = vsel %vm293, %v277, 0
        %v301 = vsel %vm293, %v278, 0
        %v304 = vsel %vm293, %v279, 0
        %v307 = vsel %vm293, %v280, 0
        %v310 = vsel %vm293, %v281, 0
        %v313 = vsel %vm293, %v282, 0
        %v316 = vsel %vm293, %v283, 0
        %v319 = vsel %vm293, %v284, 0
        %v322 = vsel %vm293, %v285, 0
        %v325 = vsel %vm293, %v286, 0
        %v328 = vsel %vm293, %v287, 0
        %v331 = vsel %vm293, %v288, 0
        %v334 = vsel %vm293, %v289, 0
        %v337 = vsel %vm293, %v290, 0
        %v340 = vsel %vm293, %v291, 0
        %vm342 = vcmask 1043456
        %v344 = vsel %vm342, %v292, 0
        %346 = vmatprep.subr.mxu0 0.0
        %347 = vmatpush1.msra.mxu0 %v344
        %348 = vmatprep.subr.mxu0 0.0
        %349 = vmatpush1.msra.mxu0 0.0
        %350 = vmatprep.subr.mxu0 0.0
        %351 = vmatpush1.msra.mxu0 0.0
        %352 = vmatprep.subr.mxu0 0.0
        %353 = vmatpush1.msra.mxu0 0.0
        %354 = vmatprep.subr.mxu0 0.0
        %355 = vmatpush1.msra.mxu0 0.0
        %356 = vmatprep.subr.mxu0 0.0
        %357 = vmatpush1.msra.mxu0 0.0
        %358 = vmatprep.subr.mxu0 0.0
        %359 = vmatpush1.msra.mxu0 0.0
        %360 = vmatprep.subr.mxu0 0.0
        %361 = vmatpush1.msra.mxu0 0.0
        %362 = vmatprep.subr.mxu0 0.0
        %363 = vmatpush1.msra.mxu0 0.0
        %364 = vmatprep.subr.mxu0 0.0
        %365 = vmatpush1.msra.mxu0 0.0
        %366 = vmatprep.subr.mxu0 0.0
        %367 = vmatpush1.msra.mxu0 0.0
        %368 = vmatprep.subr.mxu0 0.0
        %369 = vmatpush1.msra.mxu0 0.0
        %370 = vmatprep.subr.mxu0 0.0
        %371 = vmatpush1.msra.mxu0 0.0
        %372 = vmatprep.subr.mxu0 0.0
        %373 = vmatpush1.msra.mxu0 0.0
        %374 = vmatprep.subr.mxu0 0.0
        %375 = vmatpush1.msra.mxu0 0.0
        %376 = vmatprep.subr.mxu0 0.0
        %377 = vmatpush1.msra.mxu0 0.0
        %378 = vmatprep.subr.mxu0 0.0
        %379 = vmatpush1.msra.mxu0 0.0
        %380 = vmatprep.subr.mxu0 0.0
        %381 = vmatpush1.msra.mxu0 0.0
        %382 = vmatprep.subr.mxu0 0.0
        %383 = vmatpush1.msra.mxu0 0.0
        %384 = vmatprep.subr.mxu0 0.0
        %385 = vmatpush1.msra.mxu0 0.0
        %386 = vmatprep.subr.mxu0 0.0
        %387 = vmatpush1.msra.mxu0 0.0
        %388 = vmatprep.subr.mxu0 0.0
        %389 = vmatpush1.msra.mxu0 0.0
        %390 = vmatprep.subr.mxu0 0.0
        %391 = vmatpush1.msra.mxu0 0.0
        %392 = vmatprep.subr.mxu0 0.0
        %393 = vmatpush1.msra.mxu0 0.0
        %394 = vmatprep.subr.mxu0 0.0
        %395 = vmatpush1.msra.mxu0 0.0
        %396 = vmatprep.subr.mxu0 0.0
        %397 = vmatpush1.msra.mxu0 0.0
        %398 = vmatprep.subr.mxu0 0.0
        %399 = vmatpush1.msra.mxu0 0.0
        %400 = vmatprep.subr.mxu0 0.0
        %401 = vmatpush1.msra.mxu0 0.0
        %402 = vmatprep.subr.mxu0 0.0
        %403 = vmatpush1.msra.mxu0 0.0
        %404 = vmatprep.subr.mxu0 0.0
        %405 = vmatpush1.msra.mxu0 0.0
        %406 = vmatprep.subr.mxu0 0.0
        %407 = vmatpush1.msra.mxu0 0.0
        %408 = vmatprep.subr.mxu0 0.0
        %409 = vmatpush1.msra.mxu0 0.0
        %410 = vmatprep.mubr.f32.mxu0 0.0
        %411 = vmatmul.mubr.f32.gmra.mrb[0].mxu0 %v295
        %v412 = vpop.f32.mrb[0].mxu0
        %v413 = vadd.f32 0.0, %v412
        %v414 = vpop.f32.mrb[0].mxu0
        %415 = vmatprep.mubr.f32.mxu0 0.0
        %416 = vmatmul.mubr.f32.gmra.mrb[0].mxu0 %v298
        %v417 = vpop.f32.mrb[0].mxu0
        %v418 = vadd.f32 0.0, %v417
        %v419 = vpop.f32.mrb[0].mxu0
        %420 = vmatprep.mubr.f32.mxu0 0.0
        %421 = vmatmul.mubr.f32.gmra.mrb[0].mxu0 %v301
        %v422 = vpop.f32.mrb[0].mxu0
        %v423 = vadd.f32 0.0, %v422
        %v424 = vpop.f32.mrb[0].mxu0
        %425 = vmatprep.mubr.f32.mxu0 0.0
        %426 = vmatmul.mubr.f32.gmra.mrb[0].mxu0 %v304
        %v427 = vpop.f32.mrb[0].mxu0
        %v428 = vadd.f32 0.0, %v427
        %v429 = vpop.f32.mrb[0].mxu0
        %430 = vmatprep.mubr.f32.mxu0 0.0
        %431 = vmatmul.mubr.f32.gmra.mrb[0].mxu0 %v307
        %v432 = vpop.f32.mrb[0].mxu0
        %v433 = vadd.f32 0.0, %v432
        %v434 = vpop.f32.mrb[0].mxu0
        %435 = vmatprep.mubr.f32.mxu0 0.0
        %436 = vmatmul.mubr.f32.gmra.mrb[0].mxu0 %v310
        %v437 = vpop.f32.mrb[0].mxu0
        %v438 = vadd.f32 0.0, %v437
        %v439 = vpop.f32.mrb[0].mxu0
        %440 = vmatprep.mubr.f32.mxu0 0.0
        %441 = vmatmul.mubr.f32.gmra.mrb[0].mxu0 %v313
        %v442 = vpop.f32.mrb[0].mxu0
        %v443 = vadd.f32 0.0, %v442
        %v444 = vpop.f32.mrb[0].mxu0
        %445 = vmatprep.mubr.f32.mxu0 0.0
        %446 = vmatmul.mubr.f32.gmra.mrb[0].mxu0 %v316
        %v447 = vpop.f32.mrb[0].mxu0
        %v448 = vadd.f32 0.0, %v447
        %v449 = vpop.f32.mrb[0].mxu0
        %450 = vmatprep.mubr.f32.mxu0 0.0
        %451 = vmatmul.mubr.f32.gmra.mrb[0].mxu0 %v319
        %v452 = vpop.f32.mrb[0].mxu0
        %v453 = vadd.f32 0.0, %v452
        %v454 = vpop.f32.mrb[0].mxu0
        %455 = vmatprep.mubr.f32.mxu0 0.0
        %456 = vmatmul.mubr.f32.gmra.mrb[0].mxu0 %v322
        %v457 = vpop.f32.mrb[0].mxu0
        %v458 = vadd.f32 0.0, %v457
        %v459 = vpop.f32.mrb[0].mxu0
        %460 = vmatprep.mubr.f32.mxu0 0.0
        %461 = vmatmul.mubr.f32.gmra.mrb[0].mxu0 %v325
        %v462 = vpop.f32.mrb[0].mxu0
        %v463 = vadd.f32 0.0, %v462
        %v464 = vpop.f32.mrb[0].mxu0
        %465 = vmatprep.mubr.f32.mxu0 0.0
        %466 = vmatmul.mubr.f32.gmra.mrb[0].mxu0 %v328
        %v467 = vpop.f32.mrb[0].mxu0
        %v468 = vadd.f32 0.0, %v467
        %v469 = vpop.f32.mrb[0].mxu0
        %470 = vmatprep.mubr.f32.mxu0 0.0
        %471 = vmatmul.mubr.f32.gmra.mrb[0].mxu0 %v331
        %v472 = vpop.f32.mrb[0].mxu0
        %v473 = vadd.f32 0.0, %v472
        %v474 = vpop.f32.mrb[0].mxu0
        %475 = vmatprep.mubr.f32.mxu0 0.0
        %476 = vmatmul.mubr.f32.gmra.mrb[0].mxu0 %v334
        %v477 = vpop.f32.mrb[0].mxu0
        %v478 = vadd.f32 0.0, %v477
        %v479 = vpop.f32.mrb[0].mxu0
        %480 = vmatprep.mubr.f32.mxu0 0.0
        %481 = vmatmul.mubr.f32.gmra.mrb[0].mxu0 %v337
        %v482 = vpop.f32.mrb[0].mxu0
        %v483 = vadd.f32 0.0, %v482
        %v484 = vpop.f32.mrb[0].mxu0
        %485 = vmatprep.mubr.f32.mxu0 0.0
        %486 = vmatmul.mubr.f32.gmra.mrb[0].mxu0 %v340
        %v487 = vpop.f32.mrb[0].mxu0
        %v488 = vadd.f32 0.0, %v487
        %v489 = vpop.f32.mrb[0].mxu0
        %490 = vdwg.mxu0
        %v491 = vmax.f32 %v413, %v433
        %v492 = vmax.f32 %v418, %v438
        %v493 = vmax.f32 %v423, %v443
        %v494 = vmax.f32 %v428, %v448
        %v495 = vmax.f32 %v453, %v473
        %v496 = vmax.f32 %v458, %v478
        %v497 = vmax.f32 %v463, %v483
        %v498 = vmax.f32 %v468, %v488
        %v499 = vmax.f32 %v491, %v495
        %v500 = vmax.f32 %v492, %v496
        %v501 = vmax.f32 %v493, %v497
        %v502 = vmax.f32 %v494, %v498
        %v503 = vld [vmem:[%s2] sm:$0x1]
        %v505 = vlaneseq
        %v506 = vshrl.u32 %v505, 7
        %v507 = vsub.s32 0, %v506
        %v508 = vrot.slane %v503, %v507
        %v510 = vadd.f32 %v499, %v508
        %v511 = vadd.f32 %v500, %v508
        %v512 = vadd.f32 %v501, %v508
        %v513 = vadd.f32 %v502, %v508
        %v514 = vmax.f32 %v510, 0.0
        %v515 = vmax.f32 %v511, 0.0
        %v516 = vmax.f32 %v512, 0.0
        %v517 = vmax.f32 %v513, 0.0
        %vm518 = vcmask 64512
        %519 = vst.msk [vmem:[#allocation2] sm:$0xff] %vm518, %v514
        %520 = vst.msk [vmem:[#allocation2 + $0x8] sm:$0xff] %vm518, %v515
        %521 = vst.msk [vmem:[#allocation2 + $0x10] sm:$0xff] %vm518, %v516
        %522 = vst.msk [vmem:[#allocation2 + $0x18] sm:$0xff] %vm518, %v517
        %523 = vst.msk [vmem:[#allocation3] sm:$0xff] %vm518, 0.0
        %524 = vst.msk [vmem:[#allocation3 + $0x8] sm:$0xff] %vm518, 0.0
        %525 = vst.msk [vmem:[#allocation3 + $0x10] sm:$0xff] %vm518, 0.0
        %526 = vst.msk [vmem:[#allocation3 + $0x18] sm:$0xff] %vm518, 0.0
        %527 = vst.msk [vmem:[#allocation3 + $0x20] sm:$0xff] %vm518, 0.0
        %528 = vst.msk [vmem:[#allocation3 + $0x28] sm:$0xff] %vm518, 0.0
        %529 = vst.msk [vmem:[#allocation3 + $0x30] sm:$0xff] %vm518, 0.0
        %v530 = vld [vmem:[#allocation2] sm:$0x1f]
        %vm531 = vcmask 61440
        %532 = vst.msk [vmem:[#allocation3 + $0x8] sm:$0x1f] %vm531, %v530
        %v533 = vld [vmem:[#allocation2 + $0x5] sm:$0x1f]
        %534 = vst.msk [vmem:[#allocation3 + $0xf] sm:$0x1f] %vm531, %v533
        %v535 = vld [vmem:[#allocation2 + $0xa] sm:$0x1f]
        %536 = vst.msk [vmem:[#allocation3 + $0x16] sm:$0x1f] %vm531, %v535
        %v537 = vld [vmem:[#allocation2 + $0xf] sm:$0x1f]
        %538 = vst.msk [vmem:[#allocation3 + $0x1d] sm:$0x1f] %vm531, %v537
        %v539 = vld [vmem:[#allocation2 + $0x14] sm:$0x1f]
        %540 = vst.msk [vmem:[#allocation3 + $0x24] sm:$0x1f] %vm531, %v539
        %v541 = vld [vmem:[#allocation3] sm:$0xff]
        %v542 = vld [vmem:[#allocation3 + $0x8] sm:$0xff]
        %v543 = vld [vmem:[#allocation3 + $0x10] sm:$0xff]
        %v544 = vld [vmem:[#allocation3 + $0x18] sm:$0xff]
        %v545 = vld [vmem:[#allocation3 + $0x20] sm:$0xff]
        %v546 = vld [vmem:[#allocation3 + $0x28] sm:$0x3]
        %v547 = vld [vmem:[%s3] sm:$0xff]
        %v548 = vld [vmem:[#allocation3 + $0x1] sm:$0xff]
        %v549 = vld [vmem:[#allocation3 + $0x9] sm:$0xff]
        %v550 = vld [vmem:[#allocation3 + $0x11] sm:$0xff]
        %v551 = vld [vmem:[#allocation3 + $0x19] sm:$0xff]
        %v552 = vld [vmem:[#allocation3 + $0x21] sm:$0xff]
        %v553 = vld [vmem:[#allocation3 + $0x29] sm:$0x3]
        %v554 = vld [vmem:[%s3 + $0x8] sm:$0xff]
        %v556 = vsel %vm518, %v548, 0
        %v559 = vsel %vm518, %v549, 0
        %v562 = vsel %vm518, %v550, 0
        %v565 = vsel %vm518, %v551, 0
        %v568 = vsel %vm518, %v552, 0
        %v571 = vsel %vm518, %v553, 0
        %573 = vmatprep.subr.mxu0 0.0
        %574 = vmatpush1.msra.mxu0 %v554
        %575 = vmatprep.subr.mxu0 0.0
        %576 = vmatpush1.msra.mxu0 0.0
        %577 = vmatprep.subr.mxu0 0.0
        %578 = vmatpush1.msra.mxu0 0.0
        %579 = vmatprep.subr.mxu0 0.0
        %580 = vmatpush1.msra.mxu0 0.0
        %581 = vmatprep.subr.mxu0 0.0
        %582 = vmatpush1.msra.mxu0 0.0
        %583 = vmatprep.subr.mxu0 0.0
        %584 = vmatpush1.msra.mxu0 0.0
        %585 = vmatprep.subr.mxu0 0.0
        %586 = vmatpush1.msra.mxu0 0.0
        %587 = vmatprep.subr.mxu0 0.0
        %588 = vmatpush1.msra.mxu0 0.0
        %589 = vmatprep.subr.mxu0 0.0
        %590 = vmatpush1.msra.mxu0 0.0
        %591 = vmatprep.subr.mxu0 0.0
        %592 = vmatpush1.msra.mxu0 0.0
        %593 = vmatprep.subr.mxu0 0.0
        %594 = vmatpush1.msra.mxu0 0.0
        %595 = vmatprep.subr.mxu0 0.0
        %596 = vmatpush1.msra.mxu0 0.0
        %597 = vmatprep.subr.mxu0 0.0
        %598 = vmatpush1.msra.mxu0 0.0
        %599 = vmatprep.subr.mxu0 0.0
        %600 = vmatpush1.msra.mxu0 0.0
        %601 = vmatprep.subr.mxu0 0.0
        %602 = vmatpush1.msra.mxu0 0.0
        %603 = vmatprep.subr.mxu0 0.0
        %604 = vmatpush1.msra.mxu0 0.0
        %605 = vmatprep.subr.mxu0 0.0
        %606 = vmatpush1.msra.mxu0 0.0
        %607 = vmatprep.subr.mxu0 0.0
        %608 = vmatpush1.msra.mxu0 0.0
        %609 = vmatprep.subr.mxu0 0.0
        %610 = vmatpush1.msra.mxu0 0.0
        %611 = vmatprep.subr.mxu0 0.0
        %612 = vmatpush1.msra.mxu0 0.0
        %613 = vmatprep.subr.mxu0 0.0
        %614 = vmatpush1.msra.mxu0 0.0
        %615 = vmatprep.subr.mxu0 0.0
        %616 = vmatpush1.msra.mxu0 0.0
        %617 = vmatprep.subr.mxu0 0.0
        %618 = vmatpush1.msra.mxu0 0.0
        %619 = vmatprep.subr.mxu0 0.0
        %620 = vmatpush1.msra.mxu0 0.0
        %621 = vmatprep.subr.mxu0 0.0
        %622 = vmatpush1.msra.mxu0 0.0
        %623 = vmatprep.subr.mxu0 0.0
        %624 = vmatpush1.msra.mxu0 0.0
        %625 = vmatprep.subr.mxu0 0.0
        %626 = vmatpush1.msra.mxu0 0.0
        %627 = vmatprep.subr.mxu0 0.0
        %628 = vmatpush1.msra.mxu0 0.0
        %629 = vmatprep.subr.mxu0 0.0
        %630 = vmatpush1.msra.mxu0 0.0
        %631 = vmatprep.subr.mxu0 0.0
        %632 = vmatpush1.msra.mxu0 0.0
        %633 = vmatprep.subr.mxu0 0.0
        %634 = vmatpush1.msra.mxu0 0.0
        %635 = vmatprep.subr.mxu0 0.0
        %636 = vmatpush1.msra.mxu0 0.0
        %637 = vmatprep.mubr.f32.mxu0 0.0
        %638 = vmatmul.mubr.f32.gmra.mrb[0].mxu0 %v556
        %v639 = vpop.f32.mrb[0].mxu0
        %v640 = vadd.f32 0.0, %v639
        %v641 = vpop.f32.mrb[0].mxu0
        %642 = vmatprep.mubr.f32.mxu0 0.0
        %643 = vmatmul.mubr.f32.gmra.mrb[0].mxu0 %v559
        %v644 = vpop.f32.mrb[0].mxu0
        %v645 = vadd.f32 0.0, %v644
        %v646 = vpop.f32.mrb[0].mxu0
        %647 = vmatprep.mubr.f32.mxu0 0.0
        %648 = vmatmul.mubr.f32.gmra.mrb[0].mxu0 %v562
        %v649 = vpop.f32.mrb[0].mxu0
        %v650 = vadd.f32 0.0, %v649
        %v651 = vpop.f32.mrb[0].mxu0
        %652 = vmatprep.mubr.f32.mxu0 0.0
        %653 = vmatmul.mubr.f32.gmra.mrb[0].mxu0 %v565
        %v654 = vpop.f32.mrb[0].mxu0
        %v655 = vadd.f32 0.0, %v654
        %v656 = vpop.f32.mrb[0].mxu0
        %657 = vmatprep.mubr.f32.mxu0 0.0
        %658 = vmatmul.mubr.f32.gmra.mrb[0].mxu0 %v568
        %v659 = vpop.f32.mrb[0].mxu0
        %v660 = vadd.f32 0.0, %v659
        %v661 = vpop.f32.mrb[0].mxu0
        %662 = vmatprep.mubr.f32.mxu0 0.0
        %663 = vmatmul.mubr.f32.gmra.mrb[0].mxu0 %v571
        %v664 = vpop.f32.mrb[0].mxu0
        %v665 = vadd.f32 0.0, %v664
        %v666 = vpop.f32.mrb[0].mxu0
        %667 = vdwg.mxu0
        %v669 = vsel %vm518, %v541, 0
        %v672 = vsel %vm518, %v542, 0
        %v675 = vsel %vm518, %v543, 0
        %v678 = vsel %vm518, %v544, 0
        %v681 = vsel %vm518, %v545, 0
        %v684 = vsel %vm518, %v546, 0
        %686 = vmatprep.subr.mxu0 0.0
        %687 = vmatpush1.msra.mxu0 %v547
        %688 = vmatprep.subr.mxu0 0.0
        %689 = vmatpush1.msra.mxu0 0.0
        %690 = vmatprep.subr.mxu0 0.0
        %691 = vmatpush1.msra.mxu0 0.0
        %692 = vmatprep.subr.mxu0 0.0
        %693 = vmatpush1.msra.mxu0 0.0
        %694 = vmatprep.subr.mxu0 0.0
        %695 = vmatpush1.msra.mxu0 0.0
        %696 = vmatprep.subr.mxu0 0.0
        %697 = vmatpush1.msra.mxu0 0.0
        %698 = vmatprep.subr.mxu0 0.0
        %699 = vmatpush1.msra.mxu0 0.0
        %700 = vmatprep.subr.mxu0 0.0
        %701 = vmatpush1.msra.mxu0 0.0
        %702 = vmatprep.subr.mxu0 0.0
        %703 = vmatpush1.msra.mxu0 0.0
        %704 = vmatprep.subr.mxu0 0.0
        %705 = vmatpush1.msra.mxu0 0.0
        %706 = vmatprep.subr.mxu0 0.0
        %707 = vmatpush1.msra.mxu0 0.0
        %708 = vmatprep.subr.mxu0 0.0
        %709 = vmatpush1.msra.mxu0 0.0
        %710 = vmatprep.subr.mxu0 0.0
        %711 = vmatpush1.msra.mxu0 0.0
        %712 = vmatprep.subr.mxu0 0.0
        %713 = vmatpush1.msra.mxu0 0.0
        %714 = vmatprep.subr.mxu0 0.0
        %715 = vmatpush1.msra.mxu0 0.0
        %716 = vmatprep.subr.mxu0 0.0
        %717 = vmatpush1.msra.mxu0 0.0
        %718 = vmatprep.subr.mxu0 0.0
        %719 = vmatpush1.msra.mxu0 0.0
        %720 = vmatprep.subr.mxu0 0.0
        %721 = vmatpush1.msra.mxu0 0.0
        %722 = vmatprep.subr.mxu0 0.0
        %723 = vmatpush1.msra.mxu0 0.0
        %724 = vmatprep.subr.mxu0 0.0
        %725 = vmatpush1.msra.mxu0 0.0
        %726 = vmatprep.subr.mxu0 0.0
        %727 = vmatpush1.msra.mxu0 0.0
        %728 = vmatprep.subr.mxu0 0.0
        %729 = vmatpush1.msra.mxu0 0.0
        %730 = vmatprep.subr.mxu0 0.0
        %731 = vmatpush1.msra.mxu0 0.0
        %732 = vmatprep.subr.mxu0 0.0
        %733 = vmatpush1.msra.mxu0 0.0
        %734 = vmatprep.subr.mxu0 0.0
        %735 = vmatpush1.msra.mxu0 0.0
        %736 = vmatprep.subr.mxu0 0.0
        %737 = vmatpush1.msra.mxu0 0.0
        %738 = vmatprep.subr.mxu0 0.0
        %739 = vmatpush1.msra.mxu0 0.0
        %740 = vmatprep.subr.mxu0 0.0
        %741 = vmatpush1.msra.mxu0 0.0
        %742 = vmatprep.subr.mxu0 0.0
        %743 = vmatpush1.msra.mxu0 0.0
        %744 = vmatprep.subr.mxu0 0.0
        %745 = vmatpush1.msra.mxu0 0.0
        %746 = vmatprep.subr.mxu0 0.0
        %747 = vmatpush1.msra.mxu0 0.0
        %748 = vmatprep.subr.mxu0 0.0
        %749 = vmatpush1.msra.mxu0 0.0
        %750 = vmatprep.mubr.f32.mxu0 0.0
        %751 = vmatmul.mubr.f32.gmra.mrb[0].mxu0 %v669
        %v752 = vpop.f32.mrb[0].mxu0
        %v753 = vadd.f32 %v640, %v752
        %v754 = vpop.f32.mrb[0].mxu0
        %755 = vmatprep.mubr.f32.mxu0 0.0
        %756 = vmatmul.mubr.f32.gmra.mrb[0].mxu0 %v672
        %v757 = vpop.f32.mrb[0].mxu0
        %v758 = vadd.f32 %v645, %v757
        %v759 = vpop.f32.mrb[0].mxu0
        %760 = vmatprep.mubr.f32.mxu0 0.0
        %761 = vmatmul.mubr.f32.gmra.mrb[0].mxu0 %v675
        %v762 = vpop.f32.mrb[0].mxu0
        %v763 = vadd.f32 %v650, %v762
        %v764 = vpop.f32.mrb[0].mxu0
        %765 = vmatprep.mubr.f32.mxu0 0.0
        %766 = vmatmul.mubr.f32.gmra.mrb[0].mxu0 %v678
        %v767 = vpop.f32.mrb[0].mxu0
        %v768 = vadd.f32 %v655, %v767
        %v769 = vpop.f32.mrb[0].mxu0
        %770 = vmatprep.mubr.f32.mxu0 0.0
        %771 = vmatmul.mubr.f32.gmra.mrb[0].mxu0 %v681
        %v772 = vpop.f32.mrb[0].mxu0
        %v773 = vadd.f32 %v660, %v772
        %v774 = vpop.f32.mrb[0].mxu0
        %775 = vmatprep.mubr.f32.mxu0 0.0
        %776 = vmatmul.mubr.f32.gmra.mrb[0].mxu0 %v684
        %v777 = vpop.f32.mrb[0].mxu0
        %v778 = vadd.f32 %v665, %v777
        %v779 = vpop.f32.mrb[0].mxu0
        %780 = vdwg.mxu0
        %v781 = vld [vmem:[#allocation3 + $0x7] sm:$0xff]
        %v782 = vld [vmem:[#allocation3 + $0xf] sm:$0xff]
        %v783 = vld [vmem:[#allocation3 + $0x17] sm:$0xff]
        %v784 = vld [vmem:[#allocation3 + $0x1f] sm:$0xff]
        %v785 = vld [vmem:[#allocation3 + $0x27] sm:$0xff]
        %v786 = vld [vmem:[#allocation3 + $0x2f] sm:$0x3]
        %v787 = vld [vmem:[%s3 + $0x10] sm:$0xff]
        %v789 = vsel %vm518, %v781, 0
        %v792 = vsel %vm518, %v782, 0
        %v795 = vsel %vm518, %v783, 0
        %v798 = vsel %vm518, %v784, 0
        %v801 = vsel %vm518, %v785, 0
        %v804 = vsel %vm518, %v786, 0
        %806 = vmatprep.subr.mxu0 0.0
        %807 = vmatpush1.msra.mxu0 %v787
        %808 = vmatprep.subr.mxu0 0.0
        %809 = vmatpush1.msra.mxu0 0.0
        %810 = vmatprep.subr.mxu0 0.0
        %811 = vmatpush1.msra.mxu0 0.0
        %812 = vmatprep.subr.mxu0 0.0
        %813 = vmatpush1.msra.mxu0 0.0
        %814 = vmatprep.subr.mxu0 0.0
        %815 = vmatpush1.msra.mxu0 0.0
        %816 = vmatprep.subr.mxu0 0.0
        %817 = vmatpush1.msra.mxu0 0.0
        %818 = vmatprep.subr.mxu0 0.0
        %819 = vmatpush1.msra.mxu0 0.0
        %820 = vmatprep.subr.mxu0 0.0
        %821 = vmatpush1.msra.mxu0 0.0
        %822 = vmatprep.subr.mxu0 0.0
        %823 = vmatpush1.msra.mxu0 0.0
        %824 = vmatprep.subr.mxu0 0.0
        %825 = vmatpush1.msra.mxu0 0.0
        %826 = vmatprep.subr.mxu0 0.0
        %827 = vmatpush1.msra.mxu0 0.0
        %828 = vmatprep.subr.mxu0 0.0
        %829 = vmatpush1.msra.mxu0 0.0
        %830 = vmatprep.subr.mxu0 0.0
        %831 = vmatpush1.msra.mxu0 0.0
        %832 = vmatprep.subr.mxu0 0.0
        %833 = vmatpush1.msra.mxu0 0.0
        %834 = vmatprep.subr.mxu0 0.0
        %835 = vmatpush1.msra.mxu0 0.0
        %836 = vmatprep.subr.mxu0 0.0
        %837 = vmatpush1.msra.mxu0 0.0
        %838 = vmatprep.subr.mxu0 0.0
        %839 = vmatpush1.msra.mxu0 0.0
        %840 = vmatprep.subr.mxu0 0.0
        %841 = vmatpush1.msra.mxu0 0.0
        %842 = vmatprep.subr.mxu0 0.0
        %843 = vmatpush1.msra.mxu0 0.0
        %844 = vmatprep.subr.mxu0 0.0
        %845 = vmatpush1.msra.mxu0 0.0
        %846 = vmatprep.subr.mxu0 0.0
        %847 = vmatpush1.msra.mxu0 0.0
        %848 = vmatprep.subr.mxu0 0.0
        %849 = vmatpush1.msra.mxu0 0.0
        %850 = vmatprep.subr.mxu0 0.0
        %851 = vmatpush1.msra.mxu0 0.0
        %852 = vmatprep.subr.mxu0 0.0
        %853 = vmatpush1.msra.mxu0 0.0
        %854 = vmatprep.subr.mxu0 0.0
        %855 = vmatpush1.msra.mxu0 0.0
        %856 = vmatprep.subr.mxu0 0.0
        %857 = vmatpush1.msra.mxu0 0.0
        %858 = vmatprep.subr.mxu0 0.0
        %859 = vmatpush1.msra.mxu0 0.0
        %860 = vmatprep.subr.mxu0 0.0
        %861 = vmatpush1.msra.mxu0 0.0
        %862 = vmatprep.subr.mxu0 0.0
        %863 = vmatpush1.msra.mxu0 0.0
        %864 = vmatprep.subr.mxu0 0.0
        %865 = vmatpush1.msra.mxu0 0.0
        %866 = vmatprep.subr.mxu0 0.0
        %867 = vmatpush1.msra.mxu0 0.0
        %868 = vmatprep.subr.mxu0 0.0
        %869 = vmatpush1.msra.mxu0 0.0
        %870 = vmatprep.mubr.f32.mxu0 0.0
        %871 = vmatmul.mubr.f32.gmra.mrb[0].mxu0 %v789
        %v872 = vpop.f32.mrb[0].mxu0
        %v873 = vadd.f32 0.0, %v872
        %v874 = vpop.f32.mrb[0].mxu0
        %875 = vmatprep.mubr.f32.mxu0 0.0
        %876 = vmatmul.mubr.f32.gmra.mrb[0].mxu0 %v792
        %v877 = vpop.f32.mrb[0].mxu0
        %v878 = vadd.f32 0.0, %v877
        %v879 = vpop.f32.mrb[0].mxu0
        %880 = vmatprep.mubr.f32.mxu0 0.0
        %881 = vmatmul.mubr.f32.gmra.mrb[0].mxu0 %v795
        %v882 = vpop.f32.mrb[0].mxu0
        %v883 = vadd.f32 0.0, %v882
        %v884 = vpop.f32.mrb[0].mxu0
        %885 = vmatprep.mubr.f32.mxu0 0.0
        %886 = vmatmul.mubr.f32.gmra.mrb[0].mxu0 %v798
        %v887 = vpop.f32.mrb[0].mxu0
        %v888 = vadd.f32 0.0, %v887
        %v889 = vpop.f32.mrb[0].mxu0
        %890 = vmatprep.mubr.f32.mxu0 0.0
        %891 = vmatmul.mubr.f32.gmra.mrb[0].mxu0 %v801
        %v892 = vpop.f32.mrb[0].mxu0
        %v893 = vadd.f32 0.0, %v892
        %v894 = vpop.f32.mrb[0].mxu0
        %895 = vmatprep.mubr.f32.mxu0 0.0
        %896 = vmatmul.mubr.f32.gmra.mrb[0].mxu0 %v804
        %v897 = vpop.f32.mrb[0].mxu0
        %v898 = vadd.f32 0.0, %v897
        %v899 = vpop.f32.mrb[0].mxu0
        %900 = vdwg.mxu0
        %v901 = vadd.f32 %v753, %v873
        %v902 = vadd.f32 %v758, %v878
        %v903 = vadd.f32 %v763, %v883
        %v904 = vadd.f32 %v768, %v888
        %v905 = vadd.f32 %v773, %v893
        %v906 = vadd.f32 %v778, %v898
        %v907 = vld [vmem:[#allocation3 + $0x8] sm:$0xff]
        %v908 = vld [vmem:[#allocation3 + $0x10] sm:$0xff]
        %v909 = vld [vmem:[#allocation3 + $0x18] sm:$0xff]
        %v910 = vld [vmem:[#allocation3 + $0x20] sm:$0xff]
        %v911 = vld [vmem:[#allocation3 + $0x28] sm:$0xff]
        %v912 = vld [vmem:[#allocation3 + $0x30] sm:$0x3]
        %v913 = vld [vmem:[%s3 + $0x18] sm:$0xff]
        %v915 = vsel %vm518, %v907, 0
        %v918 = vsel %vm518, %v908, 0
        %v921 = vsel %vm518, %v909, 0
        %v924 = vsel %vm518, %v910, 0
        %v927 = vsel %vm518, %v911, 0
        %v930 = vsel %vm518, %v912, 0
        %932 = vmatprep.subr.mxu0 0.0
        %933 = vmatpush1.msra.mxu0 %v913
        %934 = vmatprep.subr.mxu0 0.0
        %935 = vmatpush1.msra.mxu0 0.0
        %936 = vmatprep.subr.mxu0 0.0
        %937 = vmatpush1.msra.mxu0 0.0
        %938 = vmatprep.subr.mxu0 0.0
        %939 = vmatpush1.msra.mxu0 0.0
        %940 = vmatprep.subr.mxu0 0.0
        %941 = vmatpush1.msra.mxu0 0.0
        %942 = vmatprep.subr.mxu0 0.0
        %943 = vmatpush1.msra.mxu0 0.0
        %944 = vmatprep.subr.mxu0 0.0
        %945 = vmatpush1.msra.mxu0 0.0
        %946 = vmatprep.subr.mxu0 0.0
        %947 = vmatpush1.msra.mxu0 0.0
        %948 = vmatprep.subr.mxu0 0.0
        %949 = vmatpush1.msra.mxu0 0.0
        %950 = vmatprep.subr.mxu0 0.0
        %951 = vmatpush1.msra.mxu0 0.0
        %952 = vmatprep.subr.mxu0 0.0
        %953 = vmatpush1.msra.mxu0 0.0
        %954 = vmatprep.subr.mxu0 0.0
        %955 = vmatpush1.msra.mxu0 0.0
        %956 = vmatprep.subr.mxu0 0.0
        %957 = vmatpush1.msra.mxu0 0.0
        %958 = vmatprep.subr.mxu0 0.0
        %959 = vmatpush1.msra.mxu0 0.0
        %960 = vmatprep.subr.mxu0 0.0
        %961 = vmatpush1.msra.mxu0 0.0
        %962 = vmatprep.subr.mxu0 0.0
        %963 = vmatpush1.msra.mxu0 0.0
        %964 = vmatprep.subr.mxu0 0.0
        %965 = vmatpush1.msra.mxu0 0.0
        %966 = vmatprep.subr.mxu0 0.0
        %967 = vmatpush1.msra.mxu0 0.0
        %968 = vmatprep.subr.mxu0 0.0
        %969 = vmatpush1.msra.mxu0 0.0
        %970 = vmatprep.subr.mxu0 0.0
        %971 = vmatpush1.msra.mxu0 0.0
        %972 = vmatprep.subr.mxu0 0.0
        %973 = vmatpush1.msra.mxu0 0.0
        %974 = vmatprep.subr.mxu0 0.0
        %975 = vmatpush1.msra.mxu0 0.0
        %976 = vmatprep.subr.mxu0 0.0
        %977 = vmatpush1.msra.mxu0 0.0
        %978 = vmatprep.subr.mxu0 0.0
        %979 = vmatpush1.msra.mxu0 0.0
        %980 = vmatprep.subr.mxu0 0.0
        %981 = vmatpush1.msra.mxu0 0.0
        %982 = vmatprep.subr.mxu0 0.0
        %983 = vmatpush1.msra.mxu0 0.0
        %984 = vmatprep.subr.mxu0 0.0
        %985 = vmatpush1.msra.mxu0 0.0
        %986 = vmatprep.subr.mxu0 0.0
        %987 = vmatpush1.msra.mxu0 0.0
        %988 = vmatprep.subr.mxu0 0.0
        %989 = vmatpush1.msra.mxu0 0.0
        %990 = vmatprep.subr.mxu0 0.0
        %991 = vmatpush1.msra.mxu0 0.0
        %992 = vmatprep.subr.mxu0 0.0
        %993 = vmatpush1.msra.mxu0 0.0
        %994 = vmatprep.subr.mxu0 0.0
        %995 = vmatpush1.msra.mxu0 0.0
        %996 = vmatprep.mubr.f32.mxu0 0.0
        %997 = vmatmul.mubr.f32.gmra.mrb[0].mxu0 %v915
        %v998 = vpop.f32.mrb[0].mxu0
        %v999 = vadd.f32 0.0, %v998
        %v1000 = vpop.f32.mrb[0].mxu0
        %1001 = vmatprep.mubr.f32.mxu0 0.0
        %1002 = vmatmul.mubr.f32.gmra.mrb[0].mxu0 %v918
        %v1003 = vpop.f32.mrb[0].mxu0
        %v1004 = vadd.f32 0.0, %v1003
        %v1005 = vpop.f32.mrb[0].mxu0
        %1006 = vmatprep.mubr.f32.mxu0 0.0
        %1007 = vmatmul.mubr.f32.gmra.mrb[0].mxu0 %v921
        %v1008 = vpop.f32.mrb[0].mxu0
        %v1009 = vadd.f32 0.0, %v1008
        %v1010 = vpop.f32.mrb[0].mxu0
        %1011 = vmatprep.mubr.f32.mxu0 0.0
        %1012 = vmatmul.mubr.f32.gmra.mrb[0].mxu0 %v924
        %v1013 = vpop.f32.mrb[0].mxu0
        %v1014 = vadd.f32 0.0, %v1013
        %v1015 = vpop.f32.mrb[0].mxu0
        %1016 = vmatprep.mubr.f32.mxu0 0.0
        %1017 = vmatmul.mubr.f32.gmra.mrb[0].mxu0 %v927
        %v1018 = vpop.f32.mrb[0].mxu0
        %v1019 = vadd.f32 0.0, %v1018
        %v1020 = vpop.f32.mrb[0].mxu0
        %1021 = vmatprep.mubr.f32.mxu0 0.0
        %1022 = vmatmul.mubr.f32.gmra.mrb[0].mxu0 %v930
        %v1023 = vpop.f32.mrb[0].mxu0
        %v1024 = vadd.f32 0.0, %v1023
        %v1025 = vpop.f32.mrb[0].mxu0
        %1026 = vdwg.mxu0
        %v1027 = vadd.f32 %v901, %v999
        %v1028 = vadd.f32 %v902, %v1004
        %v1029 = vadd.f32 %v903, %v1009
        %v1030 = vadd.f32 %v904, %v1014
        %v1031 = vadd.f32 %v905, %v1019
        %v1032 = vadd.f32 %v906, %v1024
        %vm1033 = vcmask 523264
        %1034 = vst.msk [vmem:[#allocation4] sm:$0xff] %vm1033, %v1027
        %1035 = vst.msk [vmem:[#allocation4 + $0x8] sm:$0xff] %vm1033, %v1028
        %1036 = vst.msk [vmem:[#allocation4 + $0x10] sm:$0xff] %vm1033, %v1029
        %1037 = vst.msk [vmem:[#allocation4 + $0x18] sm:$0xff] %vm1033, %v1030
        %1038 = vst.msk [vmem:[#allocation4 + $0x20] sm:$0xff] %vm1033, %v1031
        %vm1039 = vcmask 517120
        %1040 = vst.msk [vmem:[#allocation4 + $0x28] sm:$0x3] %vm1039, %v1032
        %v1041 = vld [vmem:[%s4] sm:$0x1]
        %v1042 = vld [vmem:[%s6] sm:$0x1]
        %v1043 = vld [vmem:[#allocation4] sm:$0x1]
        %v1044 = vld [vmem:[#allocation4 + $0x1] sm:$0x1]
        %v1045 = vmax.f32 %v1043, %v1044
        %v1046 = vld [vmem:[#allocation4 + $0x7] sm:$0x1]
        %v1047 = vld [vmem:[#allocation4 + $0x8] sm:$0x1]
        %v1048 = vmax.f32 %v1046, %v1047
        %v1049 = vmax.f32 %v1045, %v1048
        %v1050 = vadd.f32 %v1049, %v1041
        %v1051 = vmax.f32 %v1050, 0.0
        %v1052 = vld [vmem:[%s5] sm:$0xff]
        %v1053 = vld [vmem:[%s5 + $0x8] sm:$0xff]
        %v1054 = vld [vmem:[%s5 + $0x10] sm:$0xff]
        %v1055 = vld [vmem:[%s5 + $0x18] sm:$0xff]
        %v1056 = vld [vmem:[%s5 + $0x20] sm:$0xff]
        %v1057 = vld [vmem:[%s5 + $0x28] sm:$0xff]
        %v1058 = vld [vmem:[%s5 + $0x30] sm:$0xff]
        %v1059 = vld [vmem:[%s5 + $0x38] sm:$0xff]
        %v1061 = vsel %vm1033, %v1051, 0
        %1063 = vmatprep.subr.mxu0 0.0
        %1064 = vmatpush1.msra.mxu0 %v1052
        %1065 = vmatprep.subr.mxu0 0.0
        %1066 = vmatpush1.msra.mxu0 %v1053
        %1067 = vmatprep.subr.mxu0 0.0
        %1068 = vmatpush1.msra.mxu0 %v1054
        %1069 = vmatprep.subr.mxu0 0.0
        %1070 = vmatpush1.msra.mxu0 %v1055
        %1071 = vmatprep.subr.mxu0 0.0
        %1072 = vmatpush1.msra.mxu0 %v1056
        %1073 = vmatprep.subr.mxu0 0.0
        %1074 = vmatpush1.msra.mxu0 %v1057
        %1075 = vmatprep.subr.mxu0 0.0
        %1076 = vmatpush1.msra.mxu0 %v1058
        %1077 = vmatprep.subr.mxu0 0.0
        %1078 = vmatpush1.msra.mxu0 %v1059
        %1079 = vmatprep.subr.mxu0 0.0
        %1080 = vmatpush1.msra.mxu0 0.0
        %1081 = vmatprep.subr.mxu0 0.0
        %1082 = vmatpush1.msra.mxu0 0.0
        %1083 = vmatprep.subr.mxu0 0.0
        %1084 = vmatpush1.msra.mxu0 0.0
        %1085 = vmatprep.subr.mxu0 0.0
        %1086 = vmatpush1.msra.mxu0 0.0
        %1087 = vmatprep.subr.mxu0 0.0
        %1088 = vmatpush1.msra.mxu0 0.0
        %1089 = vmatprep.subr.mxu0 0.0
        %1090 = vmatpush1.msra.mxu0 0.0
        %1091 = vmatprep.subr.mxu0 0.0
        %1092 = vmatpush1.msra.mxu0 0.0
        %1093 = vmatprep.subr.mxu0 0.0
        %1094 = vmatpush1.msra.mxu0 0.0
        %1095 = vmatprep.subr.mxu0 0.0
        %1096 = vmatpush1.msra.mxu0 0.0
        %1097 = vmatprep.subr.mxu0 0.0
        %1098 = vmatpush1.msra.mxu0 0.0
        %1099 = vmatprep.subr.mxu0 0.0
        %1100 = vmatpush1.msra.mxu0 0.0
        %1101 = vmatprep.subr.mxu0 0.0
        %1102 = vmatpush1.msra.mxu0 0.0
        %1103 = vmatprep.subr.mxu0 0.0
        %1104 = vmatpush1.msra.mxu0 0.0
        %1105 = vmatprep.subr.mxu0 0.0
        %1106 = vmatpush1.msra.mxu0 0.0
        %1107 = vmatprep.subr.mxu0 0.0
        %1108 = vmatpush1.msra.mxu0 0.0
        %1109 = vmatprep.subr.mxu0 0.0
        %1110 = vmatpush1.msra.mxu0 0.0
        %1111 = vmatprep.subr.mxu0 0.0
        %1112 = vmatpush1.msra.mxu0 0.0
        %1113 = vmatprep.subr.mxu0 0.0
        %1114 = vmatpush1.msra.mxu0 0.0
        %1115 = vmatprep.subr.mxu0 0.0
        %1116 = vmatpush1.msra.mxu0 0.0
        %1117 = vmatprep.subr.mxu0 0.0
        %1118 = vmatpush1.msra.mxu0 0.0
        %1119 = vmatprep.subr.mxu0 0.0
        %1120 = vmatpush1.msra.mxu0 0.0
        %1121 = vmatprep.subr.mxu0 0.0
        %1122 = vmatpush1.msra.mxu0 0.0
        %1123 = vmatprep.subr.mxu0 0.0
        %1124 = vmatpush1.msra.mxu0 0.0
        %1125 = vmatprep.subr.mxu0 0.0
        %1126 = vmatpush1.msra.mxu0 0.0
        %1127 = vmatprep.mubr.f32.mxu0 0.0
        %1128 = vmatmul.mubr.f32.gmra.mrb[0].mxu0 %v1061
        %v1129 = vpop.f32.mrb[0].mxu0
        %v1130 = vadd.f32 0.0, %v1129
        %v1131 = vpop.f32.mrb[0].mxu0
        %1132 = vdwg.mxu0
        %v1133 = vadd.f32 %v1042, %v1130
        %v1134 = vld [vmem:[#allocation4 + $0x2] sm:$0x1]
        %v1135 = vld [vmem:[#allocation4 + $0x3] sm:$0x1]
        %v1136 = vmax.f32 %v1134, %v1135
        %v1137 = vld [vmem:[#allocation4 + $0x9] sm:$0x1]
        %v1138 = vld [vmem:[#allocation4 + $0xa] sm:$0x1]
        %v1139 = vmax.f32 %v1137, %v1138
        %v1140 = vmax.f32 %v1136, %v1139
        %v1141 = vadd.f32 %v1140, %v1041
        %v1142 = vmax.f32 %v1141, 0.0
        %s1143 = scalar_lea.vmem %s5, 64
        %v1144 = vld [vmem:[%s1143] sm:$0xff]
        %v1145 = vld [vmem:[%s1143 + $0x8] sm:$0xff]
        %v1146 = vld [vmem:[%s1143 + $0x10] sm:$0xff]
        %v1147 = vld [vmem:[%s1143 + $0x18] sm:$0xff]
        %v1148 = vld [vmem:[%s1143 + $0x20] sm:$0xff]
        %v1149 = vld [vmem:[%s1143 + $0x28] sm:$0xff]
        %v1150 = vld [vmem:[%s1143 + $0x30] sm:$0xff]
        %v1151 = vld [vmem:[%s1143 + $0x38] sm:$0xff]
        %v1153 = vsel %vm1033, %v1142, 0
        %1155 = vmatprep.subr.mxu0 0.0
        %1156 = vmatpush1.msra.mxu0 %v1144
        %1157 = vmatprep.subr.mxu0 0.0
        %1158 = vmatpush1.msra.mxu0 %v1145
        %1159 = vmatprep.subr.mxu0 0.0
        %1160 = vmatpush1.msra.mxu0 %v1146
        %1161 = vmatprep.subr.mxu0 0.0
        %1162 = vmatpush1.msra.mxu0 %v1147
        %1163 = vmatprep.subr.mxu0 0.0
        %1164 = vmatpush1.msra.mxu0 %v1148
        %1165 = vmatprep.subr.mxu0 0.0
        %1166 = vmatpush1.msra.mxu0 %v1149
        %1167 = vmatprep.subr.mxu0 0.0
        %1168 = vmatpush1.msra.mxu0 %v1150
        %1169 = vmatprep.subr.mxu0 0.0
        %1170 = vmatpush1.msra.mxu0 %v1151
        %1171 = vmatprep.subr.mxu0 0.0
        %1172 = vmatpush1.msra.mxu0 0.0
        %1173 = vmatprep.subr.mxu0 0.0
        %1174 = vmatpush1.msra.mxu0 0.0
        %1175 = vmatprep.subr.mxu0 0.0
        %1176 = vmatpush1.msra.mxu0 0.0
        %1177 = vmatprep.subr.mxu0 0.0
        %1178 = vmatpush1.msra.mxu0 0.0
        %1179 = vmatprep.subr.mxu0 0.0
        %1180 = vmatpush1.msra.mxu0 0.0
        %1181 = vmatprep.subr.mxu0 0.0
        %1182 = vmatpush1.msra.mxu0 0.0
        %1183 = vmatprep.subr.mxu0 0.0
        %1184 = vmatpush1.msra.mxu0 0.0
        %1185 = vmatprep.subr.mxu0 0.0
        %1186 = vmatpush1.msra.mxu0 0.0
        %1187 = vmatprep.subr.mxu0 0.0
        %1188 = vmatpush1.msra.mxu0 0.0
        %1189 = vmatprep.subr.mxu0 0.0
        %1190 = vmatpush1.msra.mxu0 0.0
        %1191 = vmatprep.subr.mxu0 0.0
        %1192 = vmatpush1.msra.mxu0 0.0
        %1193 = vmatprep.subr.mxu0 0.0
        %1194 = vmatpush1.msra.mxu0 0.0
        %1195 = vmatprep.subr.mxu0 0.0
        %1196 = vmatpush1.msra.mxu0 0.0
        %1197 = vmatprep.subr.mxu0 0.0
        %1198 = vmatpush1.msra.mxu0 0.0
        %1199 = vmatprep.subr.mxu0 0.0
        %1200 = vmatpush1.msra.mxu0 0.0
        %1201 = vmatprep.subr.mxu0 0.0
        %1202 = vmatpush1.msra.mxu0 0.0
        %1203 = vmatprep.subr.mxu0 0.0
        %1204 = vmatpush1.msra.mxu0 0.0
        %1205 = vmatprep.subr.mxu0 0.0
        %1206 = vmatpush1.msra.mxu0 0.0
        %1207 = vmatprep.subr.mxu0 0.0
        %1208 = vmatpush1.msra.mxu0 0.0
        %1209 = vmatprep.subr.mxu0 0.0
        %1210 = vmatpush1.msra.mxu0 0.0
        %1211 = vmatprep.subr.mxu0 0.0
        %1212 = vmatpush1.msra.mxu0 0.0
        %1213 = vmatprep.subr.mxu0 0.0
        %1214 = vmatpush1.msra.mxu0 0.0
        %1215 = vmatprep.subr.mxu0 0.0
        %1216 = vmatpush1.msra.mxu0 0.0
        %1217 = vmatprep.subr.mxu0 0.0
        %1218 = vmatpush1.msra.mxu0 0.0
        %1219 = vmatprep.mubr.f32.mxu0 0.0
        %1220 = vmatmul.mubr.f32.gmra.mrb[0].mxu0 %v1153
        %v1221 = vpop.f32.mrb[0].mxu0
        %v1222 = vadd.f32 0.0, %v1221
        %v1223 = vpop.f32.mrb[0].mxu0
        %1224 = vdwg.mxu0
        %v1225 = vadd.f32 %v1133, %v1222
        %v1226 = vld [vmem:[#allocation4 + $0x4] sm:$0x1]
        %v1227 = vld [vmem:[#allocation4 + $0x5] sm:$0x1]
        %v1228 = vmax.f32 %v1226, %v1227
        %v1229 = vld [vmem:[#allocation4 + $0xb] sm:$0x1]
        %v1230 = vld [vmem:[#allocation4 + $0xc] sm:$0x1]
        %v1231 = vmax.f32 %v1229, %v1230
        %v1232 = vmax.f32 %v1228, %v1231
        %v1233 = vadd.f32 %v1232, %v1041
        %v1234 = vmax.f32 %v1233, 0.0
        %s1235 = scalar_lea.vmem %s5, 128
        %v1236 = vld [vmem:[%s1235] sm:$0xff]
        %v1237 = vld [vmem:[%s1235 + $0x8] sm:$0xff]
        %v1238 = vld [vmem:[%s1235 + $0x10] sm:$0xff]
        %v1239 = vld [vmem:[%s1235 + $0x18] sm:$0xff]
        %v1240 = vld [vmem:[%s1235 + $0x20] sm:$0xff]
        %v1241 = vld [vmem:[%s1235 + $0x28] sm:$0xff]
        %v1242 = vld [vmem:[%s1235 + $0x30] sm:$0xff]
        %v1243 = vld [vmem:[%s1235 + $0x38] sm:$0xff]
        %v1245 = vsel %vm1033, %v1234, 0
        %1247 = vmatprep.subr.mxu0 0.0
        %1248 = vmatpush1.msra.mxu0 %v1236
        %1249 = vmatprep.subr.mxu0 0.0
        %1250 = vmatpush1.msra.mxu0 %v1237
        %1251 = vmatprep.subr.mxu0 0.0
        %1252 = vmatpush1.msra.mxu0 %v1238
        %1253 = vmatprep.subr.mxu0 0.0
        %1254 = vmatpush1.msra.mxu0 %v1239
        %1255 = vmatprep.subr.mxu0 0.0
        %1256 = vmatpush1.msra.mxu0 %v1240
        %1257 = vmatprep.subr.mxu0 0.0
        %1258 = vmatpush1.msra.mxu0 %v1241
        %1259 = vmatprep.subr.mxu0 0.0
        %1260 = vmatpush1.msra.mxu0 %v1242
        %1261 = vmatprep.subr.mxu0 0.0
        %1262 = vmatpush1.msra.mxu0 %v1243
        %1263 = vmatprep.subr.mxu0 0.0
        %1264 = vmatpush1.msra.mxu0 0.0
        %1265 = vmatprep.subr.mxu0 0.0
        %1266 = vmatpush1.msra.mxu0 0.0
        %1267 = vmatprep.subr.mxu0 0.0
        %1268 = vmatpush1.msra.mxu0 0.0
        %1269 = vmatprep.subr.mxu0 0.0
        %1270 = vmatpush1.msra.mxu0 0.0
        %1271 = vmatprep.subr.mxu0 0.0
        %1272 = vmatpush1.msra.mxu0 0.0
        %1273 = vmatprep.subr.mxu0 0.0
        %1274 = vmatpush1.msra.mxu0 0.0
        %1275 = vmatprep.subr.mxu0 0.0
        %1276 = vmatpush1.msra.mxu0 0.0
        %1277 = vmatprep.subr.mxu0 0.0
        %1278 = vmatpush1.msra.mxu0 0.0
        %1279 = vmatprep.subr.mxu0 0.0
        %1280 = vmatpush1.msra.mxu0 0.0
        %1281 = vmatprep.subr.mxu0 0.0
        %1282 = vmatpush1.msra.mxu0 0.0
        %1283 = vmatprep.subr.mxu0 0.0
        %1284 = vmatpush1.msra.mxu0 0.0
        %1285 = vmatprep.subr.mxu0 0.0
        %1286 = vmatpush1.msra.mxu0 0.0
        %1287 = vmatprep.subr.mxu0 0.0
        %1288 = vmatpush1.msra.mxu0 0.0
        %1289 = vmatprep.subr.mxu0 0.0
        %1290 = vmatpush1.msra.mxu0 0.0
        %1291 = vmatprep.subr.mxu0 0.0
        %1292 = vmatpush1.msra.mxu0 0.0
        %1293 = vmatprep.subr.mxu0 0.0
        %1294 = vmatpush1.msra.mxu0 0.0
        %1295 = vmatprep.subr.mxu0 0.0
        %1296 = vmatpush1.msra.mxu0 0.0
        %1297 = vmatprep.subr.mxu0 0.0
        %1298 = vmatpush1.msra.mxu0 0.0
        %1299 = vmatprep.subr.mxu0 0.0
        %1300 = vmatpush1.msra.mxu0 0.0
        %1301 = vmatprep.subr.mxu0 0.0
        %1302 = vmatpush1.msra.mxu0 0.0
        %1303 = vmatprep.subr.mxu0 0.0
        %1304 = vmatpush1.msra.mxu0 0.0
        %1305 = vmatprep.subr.mxu0 0.0
        %1306 = vmatpush1.msra.mxu0 0.0
        %1307 = vmatprep.subr.mxu0 0.0
        %1308 = vmatpush1.msra.mxu0 0.0
        %1309 = vmatprep.subr.mxu0 0.0
        %1310 = vmatpush1.msra.mxu0 0.0
        %1311 = vmatprep.mubr.f32.mxu0 0.0
        %1312 = vmatmul.mubr.f32.gmra.mrb[0].mxu0 %v1245
        %v1313 = vpop.f32.mrb[0].mxu0
        %v1314 = vadd.f32 0.0, %v1313
        %v1315 = vpop.f32.mrb[0].mxu0
        %1316 = vdwg.mxu0
        %v1317 = vadd.f32 %v1225, %v1314
        %v1318 = vld [vmem:[#allocation4 + $0xe] sm:$0x1]
        %v1319 = vld [vmem:[#allocation4 + $0xf] sm:$0x1]
        %v1320 = vmax.f32 %v1318, %v1319
        %v1321 = vld [vmem:[#allocation4 + $0x15] sm:$0x1]
        %v1322 = vld [vmem:[#allocation4 + $0x16] sm:$0x1]
        %v1323 = vmax.f32 %v1321, %v1322
        %v1324 = vmax.f32 %v1320, %v1323
        %v1325 = vadd.f32 %v1324, %v1041
        %v1326 = vmax.f32 %v1325, 0.0
        %s1327 = scalar_lea.vmem %s5, 192
        %v1328 = vld [vmem:[%s1327] sm:$0xff]
        %v1329 = vld [vmem:[%s1327 + $0x8] sm:$0xff]
        %v1330 = vld [vmem:[%s1327 + $0x10] sm:$0xff]
        %v1331 = vld [vmem:[%s1327 + $0x18] sm:$0xff]
        %v1332 = vld [vmem:[%s1327 + $0x20] sm:$0xff]
        %v1333 = vld [vmem:[%s1327 + $0x28] sm:$0xff]
        %v1334 = vld [vmem:[%s1327 + $0x30] sm:$0xff]
        %v1335 = vld [vmem:[%s1327 + $0x38] sm:$0xff]
        %v1337 = vsel %vm1033, %v1326, 0
        %1339 = vmatprep.subr.mxu0 0.0
        %1340 = vmatpush1.msra.mxu0 %v1328
        %1341 = vmatprep.subr.mxu0 0.0
        %1342 = vmatpush1.msra.mxu0 %v1329
        %1343 = vmatprep.subr.mxu0 0.0
        %1344 = vmatpush1.msra.mxu0 %v1330
        %1345 = vmatprep.subr.mxu0 0.0
        %1346 = vmatpush1.msra.mxu0 %v1331
        %1347 = vmatprep.subr.mxu0 0.0
        %1348 = vmatpush1.msra.mxu0 %v1332
        %1349 = vmatprep.subr.mxu0 0.0
        %1350 = vmatpush1.msra.mxu0 %v1333
        %1351 = vmatprep.subr.mxu0 0.0
        %1352 = vmatpush1.msra.mxu0 %v1334
        %1353 = vmatprep.subr.mxu0 0.0
        %1354 = vmatpush1.msra.mxu0 %v1335
        %1355 = vmatprep.subr.mxu0 0.0
        %1356 = vmatpush1.msra.mxu0 0.0
        %1357 = vmatprep.subr.mxu0 0.0
        %1358 = vmatpush1.msra.mxu0 0.0
        %1359 = vmatprep.subr.mxu0 0.0
        %1360 = vmatpush1.msra.mxu0 0.0
        %1361 = vmatprep.subr.mxu0 0.0
        %1362 = vmatpush1.msra.mxu0 0.0
        %1363 = vmatprep.subr.mxu0 0.0
        %1364 = vmatpush1.msra.mxu0 0.0
        %1365 = vmatprep.subr.mxu0 0.0
        %1366 = vmatpush1.msra.mxu0 0.0
        %1367 = vmatprep.subr.mxu0 0.0
        %1368 = vmatpush1.msra.mxu0 0.0
        %1369 = vmatprep.subr.mxu0 0.0
        %1370 = vmatpush1.msra.mxu0 0.0
        %1371 = vmatprep.subr.mxu0 0.0
        %1372 = vmatpush1.msra.mxu0 0.0
        %1373 = vmatprep.subr.mxu0 0.0
        %1374 = vmatpush1.msra.mxu0 0.0
        %1375 = vmatprep.subr.mxu0 0.0
        %1376 = vmatpush1.msra.mxu0 0.0
        %1377 = vmatprep.subr.mxu0 0.0
        %1378 = vmatpush1.msra.mxu0 0.0
        %1379 = vmatprep.subr.mxu0 0.0
        %1380 = vmatpush1.msra.mxu0 0.0
        %1381 = vmatprep.subr.mxu0 0.0
        %1382 = vmatpush1.msra.mxu0 0.0
        %1383 = vmatprep.subr.mxu0 0.0
        %1384 = vmatpush1.msra.mxu0 0.0
        %1385 = vmatprep.subr.mxu0 0.0
        %1386 = vmatpush1.msra.mxu0 0.0
        %1387 = vmatprep.subr.mxu0 0.0
        %1388 = vmatpush1.msra.mxu0 0.0
        %1389 = vmatprep.subr.mxu0 0.0
        %1390 = vmatpush1.msra.mxu0 0.0
        %1391 = vmatprep.subr.mxu0 0.0
        %1392 = vmatpush1.msra.mxu0 0.0
        %1393 = vmatprep.subr.mxu0 0.0
        %1394 = vmatpush1.msra.mxu0 0.0
        %1395 = vmatprep.subr.mxu0 0.0
        %1396 = vmatpush1.msra.mxu0 0.0
        %1397 = vmatprep.subr.mxu0 0.0
        %1398 = vmatpush1.msra.mxu0 0.0
        %1399 = vmatprep.subr.mxu0 0.0
        %1400 = vmatpush1.msra.mxu0 0.0
        %1401 = vmatprep.subr.mxu0 0.0
        %1402 = vmatpush1.msra.mxu0 0.0
        %1403 = vmatprep.mubr.f32.mxu0 0.0
        %1404 = vmatmul.mubr.f32.gmra.mrb[0].mxu0 %v1337
        %v1405 = vpop.f32.mrb[0].mxu0
        %v1406 = vadd.f32 0.0, %v1405
        %v1407 = vpop.f32.mrb[0].mxu0
        %1408 = vdwg.mxu0
        %v1409 = vadd.f32 %v1317, %v1406
        %v1410 = vld [vmem:[#allocation4 + $0x10] sm:$0x1]
        %v1411 = vld [vmem:[#allocation4 + $0x11] sm:$0x1]
        %v1412 = vmax.f32 %v1410, %v1411
        %v1413 = vld [vmem:[#allocation4 + $0x17] sm:$0x1]
        %v1414 = vld [vmem:[#allocation4 + $0x18] sm:$0x1]
        %v1415 = vmax.f32 %v1413, %v1414
        %v1416 = vmax.f32 %v1412, %v1415
        %v1417 = vadd.f32 %v1416, %v1041
        %v1418 = vmax.f32 %v1417, 0.0
        %s1419 = scalar_lea.vmem %s5, 256
        %v1420 = vld [vmem:[%s1419] sm:$0xff]
        %v1421 = vld [vmem:[%s1419 + $0x8] sm:$0xff]
        %v1422 = vld [vmem:[%s1419 + $0x10] sm:$0xff]
        %v1423 = vld [vmem:[%s1419 + $0x18] sm:$0xff]
        %v1424 = vld [vmem:[%s1419 + $0x20] sm:$0xff]
        %v1425 = vld [vmem:[%s1419 + $0x28] sm:$0xff]
        %v1426 = vld [vmem:[%s1419 + $0x30] sm:$0xff]
        %v1427 = vld [vmem:[%s1419 + $0x38] sm:$0xff]
        %v1429 = vsel %vm1033, %v1418, 0
        %1431 = vmatprep.subr.mxu0 0.0
        %1432 = vmatpush1.msra.mxu0 %v1420
        %1433 = vmatprep.subr.mxu0 0.0
        %1434 = vmatpush1.msra.mxu0 %v1421
        %1435 = vmatprep.subr.mxu0 0.0
        %1436 = vmatpush1.msra.mxu0 %v1422
        %1437 = vmatprep.subr.mxu0 0.0
        %1438 = vmatpush1.msra.mxu0 %v1423
        %1439 = vmatprep.subr.mxu0 0.0
        %1440 = vmatpush1.msra.mxu0 %v1424
        %1441 = vmatprep.subr.mxu0 0.0
        %1442 = vmatpush1.msra.mxu0 %v1425
        %1443 = vmatprep.subr.mxu0 0.0
        %1444 = vmatpush1.msra.mxu0 %v1426
        %1445 = vmatprep.subr.mxu0 0.0
        %1446 = vmatpush1.msra.mxu0 %v1427
        %1447 = vmatprep.subr.mxu0 0.0
        %1448 = vmatpush1.msra.mxu0 0.0
        %1449 = vmatprep.subr.mxu0 0.0
        %1450 = vmatpush1.msra.mxu0 0.0
        %1451 = vmatprep.subr.mxu0 0.0
        %1452 = vmatpush1.msra.mxu0 0.0
        %1453 = vmatprep.subr.mxu0 0.0
        %1454 = vmatpush1.msra.mxu0 0.0
        %1455 = vmatprep.subr.mxu0 0.0
        %1456 = vmatpush1.msra.mxu0 0.0
        %1457 = vmatprep.subr.mxu0 0.0
        %1458 = vmatpush1.msra.mxu0 0.0
        %1459 = vmatprep.subr.mxu0 0.0
        %1460 = vmatpush1.msra.mxu0 0.0
        %1461 = vmatprep.subr.mxu0 0.0
        %1462 = vmatpush1.msra.mxu0 0.0
        %1463 = vmatprep.subr.mxu0 0.0
        %1464 = vmatpush1.msra.mxu0 0.0
        %1465 = vmatprep.subr.mxu0 0.0
        %1466 = vmatpush1.msra.mxu0 0.0
        %1467 = vmatprep.subr.mxu0 0.0
        %1468 = vmatpush1.msra.mxu0 0.0
        %1469 = vmatprep.subr.mxu0 0.0
        %1470 = vmatpush1.msra.mxu0 0.0
        %1471 = vmatprep.subr.mxu0 0.0
        %1472 = vmatpush1.msra.mxu0 0.0
        %1473 = vmatprep.subr.mxu0 0.0
        %1474 = vmatpush1.msra.mxu0 0.0
        %1475 = vmatprep.subr.mxu0 0.0
        %1476 = vmatpush1.msra.mxu0 0.0
        %1477 = vmatprep.subr.mxu0 0.0
        %1478 = vmatpush1.msra.mxu0 0.0
        %1479 = vmatprep.subr.mxu0 0.0
        %1480 = vmatpush1.msra.mxu0 0.0
        %1481 = vmatprep.subr.mxu0 0.0
        %1482 = vmatpush1.msra.mxu0 0.0
        %1483 = vmatprep.subr.mxu0 0.0
        %1484 = vmatpush1.msra.mxu0 0.0
        %1485 = vmatprep.subr.mxu0 0.0
        %1486 = vmatpush1.msra.mxu0 0.0
        %1487 = vmatprep.subr.mxu0 0.0
        %1488 = vmatpush1.msra.mxu0 0.0
        %1489 = vmatprep.subr.mxu0 0.0
        %1490 = vmatpush1.msra.mxu0 0.0
        %1491 = vmatprep.subr.mxu0 0.0
        %1492 = vmatpush1.msra.mxu0 0.0
        %1493 = vmatprep.subr.mxu0 0.0
        %1494 = vmatpush1.msra.mxu0 0.0
        %1495 = vmatprep.mubr.f32.mxu0 0.0
        %1496 = vmatmul.mubr.f32.gmra.mrb[0].mxu0 %v1429
        %v1497 = vpop.f32.mrb[0].mxu0
        %v1498 = vadd.f32 0.0, %v1497
        %v1499 = vpop.f32.mrb[0].mxu0
        %1500 = vdwg.mxu0
        %v1501 = vadd.f32 %v1409, %v1498
        %v1502 = vld [vmem:[#allocation4 + $0x12] sm:$0x1]
        %v1503 = vld [vmem:[#allocation4 + $0x13] sm:$0x1]
        %v1504 = vmax.f32 %v1502, %v1503
        %v1505 = vld [vmem:[#allocation4 + $0x19] sm:$0x1]
        %v1506 = vld [vmem:[#allocation4 + $0x1a] sm:$0x1]
        %v1507 = vmax.f32 %v1505, %v1506
        %v1508 = vmax.f32 %v1504, %v1507
        %v1509 = vadd.f32 %v1508, %v1041
        %v1510 = vmax.f32 %v1509, 0.0
        %s1511 = scalar_lea.vmem %s5, 320
        %v1512 = vld [vmem:[%s1511] sm:$0xff]
        %v1513 = vld [vmem:[%s1511 + $0x8] sm:$0xff]
        %v1514 = vld [vmem:[%s1511 + $0x10] sm:$0xff]
        %v1515 = vld [vmem:[%s1511 + $0x18] sm:$0xff]
        %v1516 = vld [vmem:[%s1511 + $0x20] sm:$0xff]
        %v1517 = vld [vmem:[%s1511 + $0x28] sm:$0xff]
        %v1518 = vld [vmem:[%s1511 + $0x30] sm:$0xff]
        %v1519 = vld [vmem:[%s1511 + $0x38] sm:$0xff]
        %v1521 = vsel %vm1033, %v1510, 0
        %1523 = vmatprep.subr.mxu0 0.0
        %1524 = vmatpush1.msra.mxu0 %v1512
        %1525 = vmatprep.subr.mxu0 0.0
        %1526 = vmatpush1.msra.mxu0 %v1513
        %1527 = vmatprep.subr.mxu0 0.0
        %1528 = vmatpush1.msra.mxu0 %v1514
        %1529 = vmatprep.subr.mxu0 0.0
        %1530 = vmatpush1.msra.mxu0 %v1515
        %1531 = vmatprep.subr.mxu0 0.0
        %1532 = vmatpush1.msra.mxu0 %v1516
        %1533 = vmatprep.subr.mxu0 0.0
        %1534 = vmatpush1.msra.mxu0 %v1517
        %1535 = vmatprep.subr.mxu0 0.0
        %1536 = vmatpush1.msra.mxu0 %v1518
        %1537 = vmatprep.subr.mxu0 0.0
        %1538 = vmatpush1.msra.mxu0 %v1519
        %1539 = vmatprep.subr.mxu0 0.0
        %1540 = vmatpush1.msra.mxu0 0.0
        %1541 = vmatprep.subr.mxu0 0.0
        %1542 = vmatpush1.msra.mxu0 0.0
        %1543 = vmatprep.subr.mxu0 0.0
        %1544 = vmatpush1.msra.mxu0 0.0
        %1545 = vmatprep.subr.mxu0 0.0
        %1546 = vmatpush1.msra.mxu0 0.0
        %1547 = vmatprep.subr.mxu0 0.0
        %1548 = vmatpush1.msra.mxu0 0.0
        %1549 = vmatprep.subr.mxu0 0.0
        %1550 = vmatpush1.msra.mxu0 0.0
        %1551 = vmatprep.subr.mxu0 0.0
        %1552 = vmatpush1.msra.mxu0 0.0
        %1553 = vmatprep.subr.mxu0 0.0
        %1554 = vmatpush1.msra.mxu0 0.0
        %1555 = vmatprep.subr.mxu0 0.0
        %1556 = vmatpush1.msra.mxu0 0.0
        %1557 = vmatprep.subr.mxu0 0.0
        %1558 = vmatpush1.msra.mxu0 0.0
        %1559 = vmatprep.subr.mxu0 0.0
        %1560 = vmatpush1.msra.mxu0 0.0
        %1561 = vmatprep.subr.mxu0 0.0
        %1562 = vmatpush1.msra.mxu0 0.0
        %1563 = vmatprep.subr.mxu0 0.0
        %1564 = vmatpush1.msra.mxu0 0.0
        %1565 = vmatprep.subr.mxu0 0.0
        %1566 = vmatpush1.msra.mxu0 0.0
        %1567 = vmatprep.subr.mxu0 0.0
        %1568 = vmatpush1.msra.mxu0 0.0
        %1569 = vmatprep.subr.mxu0 0.0
        %1570 = vmatpush1.msra.mxu0 0.0
        %1571 = vmatprep.subr.mxu0 0.0
        %1572 = vmatpush1.msra.mxu0 0.0
        %1573 = vmatprep.subr.mxu0 0.0
        %1574 = vmatpush1.msra.mxu0 0.0
        %1575 = vmatprep.subr.mxu0 0.0
        %1576 = vmatpush1.msra.mxu0 0.0
        %1577 = vmatprep.subr.mxu0 0.0
        %1578 = vmatpush1.msra.mxu0 0.0
        %1579 = vmatprep.subr.mxu0 0.0
        %1580 = vmatpush1.msra.mxu0 0.0
        %1581 = vmatprep.subr.mxu0 0.0
        %1582 = vmatpush1.msra.mxu0 0.0
        %1583 = vmatprep.subr.mxu0 0.0
        %1584 = vmatpush1.msra.mxu0 0.0
        %1585 = vmatprep.subr.mxu0 0.0
        %1586 = vmatpush1.msra.mxu0 0.0
        %1587 = vmatprep.mubr.f32.mxu0 0.0
        %1588 = vmatmul.mubr.f32.gmra.mrb[0].mxu0 %v1521
        %v1589 = vpop.f32.mrb[0].mxu0
        %v1590 = vadd.f32 0.0, %v1589
        %v1591 = vpop.f32.mrb[0].mxu0
        %1592 = vdwg.mxu0
        %v1593 = vadd.f32 %v1501, %v1590
        %v1594 = vld [vmem:[#allocation4 + $0x1c] sm:$0x1]
        %v1595 = vld [vmem:[#allocation4 + $0x1d] sm:$0x1]
        %v1596 = vmax.f32 %v1594, %v1595
        %v1597 = vld [vmem:[#allocation4 + $0x23] sm:$0x1]
        %v1598 = vld [vmem:[#allocation4 + $0x24] sm:$0x1]
        %v1599 = vmax.f32 %v1597, %v1598
        %v1600 = vmax.f32 %v1596, %v1599
        %v1601 = vadd.f32 %v1600, %v1041
        %v1602 = vmax.f32 %v1601, 0.0
        %s1603 = scalar_lea.vmem %s5, 384
        %v1604 = vld [vmem:[%s1603] sm:$0xff]
        %v1605 = vld [vmem:[%s1603 + $0x8] sm:$0xff]
        %v1606 = vld [vmem:[%s1603 + $0x10] sm:$0xff]
        %v1607 = vld [vmem:[%s1603 + $0x18] sm:$0xff]
        %v1608 = vld [vmem:[%s1603 + $0x20] sm:$0xff]
        %v1609 = vld [vmem:[%s1603 + $0x28] sm:$0xff]
        %v1610 = vld [vmem:[%s1603 + $0x30] sm:$0xff]
        %v1611 = vld [vmem:[%s1603 + $0x38] sm:$0xff]
        %v1613 = vsel %vm1033, %v1602, 0
        %1615 = vmatprep.subr.mxu0 0.0
        %1616 = vmatpush1.msra.mxu0 %v1604
        %1617 = vmatprep.subr.mxu0 0.0
        %1618 = vmatpush1.msra.mxu0 %v1605
        %1619 = vmatprep.subr.mxu0 0.0
        %1620 = vmatpush1.msra.mxu0 %v1606
        %1621 = vmatprep.subr.mxu0 0.0
        %1622 = vmatpush1.msra.mxu0 %v1607
        %1623 = vmatprep.subr.mxu0 0.0
        %1624 = vmatpush1.msra.mxu0 %v1608
        %1625 = vmatprep.subr.mxu0 0.0
        %1626 = vmatpush1.msra.mxu0 %v1609
        %1627 = vmatprep.subr.mxu0 0.0
        %1628 = vmatpush1.msra.mxu0 %v1610
        %1629 = vmatprep.subr.mxu0 0.0
        %1630 = vmatpush1.msra.mxu0 %v1611
        %1631 = vmatprep.subr.mxu0 0.0
        %1632 = vmatpush1.msra.mxu0 0.0
        %1633 = vmatprep.subr.mxu0 0.0
        %1634 = vmatpush1.msra.mxu0 0.0
        %1635 = vmatprep.subr.mxu0 0.0
        %1636 = vmatpush1.msra.mxu0 0.0
        %1637 = vmatprep.subr.mxu0 0.0
        %1638 = vmatpush1.msra.mxu0 0.0
        %1639 = vmatprep.subr.mxu0 0.0
        %1640 = vmatpush1.msra.mxu0 0.0
        %1641 = vmatprep.subr.mxu0 0.0
        %1642 = vmatpush1.msra.mxu0 0.0
        %1643 = vmatprep.subr.mxu0 0.0
        %1644 = vmatpush1.msra.mxu0 0.0
        %1645 = vmatprep.subr.mxu0 0.0
        %1646 = vmatpush1.msra.mxu0 0.0
        %1647 = vmatprep.subr.mxu0 0.0
        %1648 = vmatpush1.msra.mxu0 0.0
        %1649 = vmatprep.subr.mxu0 0.0
        %1650 = vmatpush1.msra.mxu0 0.0
        %1651 = vmatprep.subr.mxu0 0.0
        %1652 = vmatpush1.msra.mxu0 0.0
        %1653 = vmatprep.subr.mxu0 0.0
        %1654 = vmatpush1.msra.mxu0 0.0
        %1655 = vmatprep.subr.mxu0 0.0
        %1656 = vmatpush1.msra.mxu0 0.0
        %1657 = vmatprep.subr.mxu0 0.0
        %1658 = vmatpush1.msra.mxu0 0.0
        %1659 = vmatprep.subr.mxu0 0.0
        %1660 = vmatpush1.msra.mxu0 0.0
        %1661 = vmatprep.subr.mxu0 0.0
        %1662 = vmatpush1.msra.mxu0 0.0
        %1663 = vmatprep.subr.mxu0 0.0
        %1664 = vmatpush1.msra.mxu0 0.0
        %1665 = vmatprep.subr.mxu0 0.0
        %1666 = vmatpush1.msra.mxu0 0.0
        %1667 = vmatprep.subr.mxu0 0.0
        %1668 = vmatpush1.msra.mxu0 0.0
        %1669 = vmatprep.subr.mxu0 0.0
        %1670 = vmatpush1.msra.mxu0 0.0
        %1671 = vmatprep.subr.mxu0 0.0
        %1672 = vmatpush1.msra.mxu0 0.0
        %1673 = vmatprep.subr.mxu0 0.0
        %1674 = vmatpush1.msra.mxu0 0.0
        %1675 = vmatprep.subr.mxu0 0.0
        %1676 = vmatpush1.msra.mxu0 0.0
        %1677 = vmatprep.subr.mxu0 0.0
        %1678 = vmatpush1.msra.mxu0 0.0
        %1679 = vmatprep.mubr.f32.mxu0 0.0
        %1680 = vmatmul.mubr.f32.gmra.mrb[0].mxu0 %v1613
        %v1681 = vpop.f32.mrb[0].mxu0
        %v1682 = vadd.f32 0.0, %v1681
        %v1683 = vpop.f32.mrb[0].mxu0
        %1684 = vdwg.mxu0
        %v1685 = vadd.f32 %v1593, %v1682
        %v1686 = vld [vmem:[#allocation4 + $0x1e] sm:$0x1]
        %v1687 = vld [vmem:[#allocation4 + $0x1f] sm:$0x1]
        %v1688 = vmax.f32 %v1686, %v1687
        %v1689 = vld [vmem:[#allocation4 + $0x25] sm:$0x1]
        %v1690 = vld [vmem:[#allocation4 + $0x26] sm:$0x1]
        %v1691 = vmax.f32 %v1689, %v1690
        %v1692 = vmax.f32 %v1688, %v1691
        %v1693 = vadd.f32 %v1692, %v1041
        %v1694 = vmax.f32 %v1693, 0.0
        %s1695 = scalar_lea.vmem %s5, 448
        %v1696 = vld [vmem:[%s1695] sm:$0xff]
        %v1697 = vld [vmem:[%s1695 + $0x8] sm:$0xff]
        %v1698 = vld [vmem:[%s1695 + $0x10] sm:$0xff]
        %v1699 = vld [vmem:[%s1695 + $0x18] sm:$0xff]
        %v1700 = vld [vmem:[%s1695 + $0x20] sm:$0xff]
        %v1701 = vld [vmem:[%s1695 + $0x28] sm:$0xff]
        %v1702 = vld [vmem:[%s1695 + $0x30] sm:$0xff]
        %v1703 = vld [vmem:[%s1695 + $0x38] sm:$0xff]
        %v1705 = vsel %vm1033, %v1694, 0
        %1707 = vmatprep.subr.mxu0 0.0
        %1708 = vmatpush1.msra.mxu0 %v1696
        %1709 = vmatprep.subr.mxu0 0.0
        %1710 = vmatpush1.msra.mxu0 %v1697
        %1711 = vmatprep.subr.mxu0 0.0
        %1712 = vmatpush1.msra.mxu0 %v1698
        %1713 = vmatprep.subr.mxu0 0.0
        %1714 = vmatpush1.msra.mxu0 %v1699
        %1715 = vmatprep.subr.mxu0 0.0
        %1716 = vmatpush1.msra.mxu0 %v1700
        %1717 = vmatprep.subr.mxu0 0.0
        %1718 = vmatpush1.msra.mxu0 %v1701
        %1719 = vmatprep.subr.mxu0 0.0
        %1720 = vmatpush1.msra.mxu0 %v1702
        %1721 = vmatprep.subr.mxu0 0.0
        %1722 = vmatpush1.msra.mxu0 %v1703
        %1723 = vmatprep.subr.mxu0 0.0
        %1724 = vmatpush1.msra.mxu0 0.0
        %1725 = vmatprep.subr.mxu0 0.0
        %1726 = vmatpush1.msra.mxu0 0.0
        %1727 = vmatprep.subr.mxu0 0.0
        %1728 = vmatpush1.msra.mxu0 0.0
        %1729 = vmatprep.subr.mxu0 0.0
        %1730 = vmatpush1.msra.mxu0 0.0
        %1731 = vmatprep.subr.mxu0 0.0
        %1732 = vmatpush1.msra.mxu0 0.0
        %1733 = vmatprep.subr.mxu0 0.0
        %1734 = vmatpush1.msra.mxu0 0.0
        %1735 = vmatprep.subr.mxu0 0.0
        %1736 = vmatpush1.msra.mxu0 0.0
        %1737 = vmatprep.subr.mxu0 0.0
        %1738 = vmatpush1.msra.mxu0 0.0
        %1739 = vmatprep.subr.mxu0 0.0
        %1740 = vmatpush1.msra.mxu0 0.0
        %1741 = vmatprep.subr.mxu0 0.0
        %1742 = vmatpush1.msra.mxu0 0.0
        %1743 = vmatprep.subr.mxu0 0.0
        %1744 = vmatpush1.msra.mxu0 0.0
        %1745 = vmatprep.subr.mxu0 0.0
        %1746 = vmatpush1.msra.mxu0 0.0
        %1747 = vmatprep.subr.mxu0 0.0
        %1748 = vmatpush1.msra.mxu0 0.0
        %1749 = vmatprep.subr.mxu0 0.0
        %1750 = vmatpush1.msra.mxu0 0.0
        %1751 = vmatprep.subr.mxu0 0.0
        %1752 = vmatpush1.msra.mxu0 0.0
        %1753 = vmatprep.subr.mxu0 0.0
        %1754 = vmatpush1.msra.mxu0 0.0
        %1755 = vmatprep.subr.mxu0 0.0
        %1756 = vmatpush1.msra.mxu0 0.0
        %1757 = vmatprep.subr.mxu0 0.0
        %1758 = vmatpush1.msra.mxu0 0.0
        %1759 = vmatprep.subr.mxu0 0.0
        %1760 = vmatpush1.msra.mxu0 0.0
        %1761 = vmatprep.subr.mxu0 0.0
        %1762 = vmatpush1.msra.mxu0 0.0
        %1763 = vmatprep.subr.mxu0 0.0
        %1764 = vmatpush1.msra.mxu0 0.0
        %1765 = vmatprep.subr.mxu0 0.0
        %1766 = vmatpush1.msra.mxu0 0.0
        %1767 = vmatprep.subr.mxu0 0.0
        %1768 = vmatpush1.msra.mxu0 0.0
        %1769 = vmatprep.subr.mxu0 0.0
        %1770 = vmatpush1.msra.mxu0 0.0
        %1771 = vmatprep.mubr.f32.mxu0 0.0
        %1772 = vmatmul.mubr.f32.gmra.mrb[0].mxu0 %v1705
        %v1773 = vpop.f32.mrb[0].mxu0
        %v1774 = vadd.f32 0.0, %v1773
        %v1775 = vpop.f32.mrb[0].mxu0
        %1776 = vdwg.mxu0
        %v1777 = vadd.f32 %v1685, %v1774
        %v1778 = vld [vmem:[#allocation4 + $0x20] sm:$0x1]
        %v1779 = vld [vmem:[#allocation4 + $0x21] sm:$0x1]
        %v1780 = vmax.f32 %v1778, %v1779
        %v1781 = vld [vmem:[#allocation4 + $0x27] sm:$0x1]
        %v1782 = vld [vmem:[#allocation4 + $0x28] sm:$0x1]
        %v1783 = vmax.f32 %v1781, %v1782
        %v1784 = vmax.f32 %v1780, %v1783
        %v1785 = vadd.f32 %v1784, %v1041
        %v1786 = vmax.f32 %v1785, 0.0
        %s1787 = scalar_lea.vmem %s5, 512
        %v1788 = vld [vmem:[%s1787] sm:$0xff]
        %v1789 = vld [vmem:[%s1787 + $0x8] sm:$0xff]
        %v1790 = vld [vmem:[%s1787 + $0x10] sm:$0xff]
        %v1791 = vld [vmem:[%s1787 + $0x18] sm:$0xff]
        %v1792 = vld [vmem:[%s1787 + $0x20] sm:$0xff]
        %v1793 = vld [vmem:[%s1787 + $0x28] sm:$0xff]
        %v1794 = vld [vmem:[%s1787 + $0x30] sm:$0xff]
        %v1795 = vld [vmem:[%s1787 + $0x38] sm:$0xff]
        %v1797 = vsel %vm1033, %v1786, 0
        %1799 = vmatprep.subr.mxu0 0.0
        %1800 = vmatpush1.msra.mxu0 %v1788
        %1801 = vmatprep.subr.mxu0 0.0
        %1802 = vmatpush1.msra.mxu0 %v1789
        %1803 = vmatprep.subr.mxu0 0.0
        %1804 = vmatpush1.msra.mxu0 %v1790
        %1805 = vmatprep.subr.mxu0 0.0
        %1806 = vmatpush1.msra.mxu0 %v1791
        %1807 = vmatprep.subr.mxu0 0.0
        %1808 = vmatpush1.msra.mxu0 %v1792
        %1809 = vmatprep.subr.mxu0 0.0
        %1810 = vmatpush1.msra.mxu0 %v1793
        %1811 = vmatprep.subr.mxu0 0.0
        %1812 = vmatpush1.msra.mxu0 %v1794
        %1813 = vmatprep.subr.mxu0 0.0
        %1814 = vmatpush1.msra.mxu0 %v1795
        %1815 = vmatprep.subr.mxu0 0.0
        %1816 = vmatpush1.msra.mxu0 0.0
        %1817 = vmatprep.subr.mxu0 0.0
        %1818 = vmatpush1.msra.mxu0 0.0
        %1819 = vmatprep.subr.mxu0 0.0
        %1820 = vmatpush1.msra.mxu0 0.0
        %1821 = vmatprep.subr.mxu0 0.0
        %1822 = vmatpush1.msra.mxu0 0.0
        %1823 = vmatprep.subr.mxu0 0.0
        %1824 = vmatpush1.msra.mxu0 0.0
        %1825 = vmatprep.subr.mxu0 0.0
        %1826 = vmatpush1.msra.mxu0 0.0
        %1827 = vmatprep.subr.mxu0 0.0
        %1828 = vmatpush1.msra.mxu0 0.0
        %1829 = vmatprep.subr.mxu0 0.0
        %1830 = vmatpush1.msra.mxu0 0.0
        %1831 = vmatprep.subr.mxu0 0.0
        %1832 = vmatpush1.msra.mxu0 0.0
        %1833 = vmatprep.subr.mxu0 0.0
        %1834 = vmatpush1.msra.mxu0 0.0
        %1835 = vmatprep.subr.mxu0 0.0
        %1836 = vmatpush1.msra.mxu0 0.0
        %1837 = vmatprep.subr.mxu0 0.0
        %1838 = vmatpush1.msra.mxu0 0.0
        %1839 = vmatprep.subr.mxu0 0.0
        %1840 = vmatpush1.msra.mxu0 0.0
        %1841 = vmatprep.subr.mxu0 0.0
        %1842 = vmatpush1.msra.mxu0 0.0
        %1843 = vmatprep.subr.mxu0 0.0
        %1844 = vmatpush1.msra.mxu0 0.0
        %1845 = vmatprep.subr.mxu0 0.0
        %1846 = vmatpush1.msra.mxu0 0.0
        %1847 = vmatprep.subr.mxu0 0.0
        %1848 = vmatpush1.msra.mxu0 0.0
        %1849 = vmatprep.subr.mxu0 0.0
        %1850 = vmatpush1.msra.mxu0 0.0
        %1851 = vmatprep.subr.mxu0 0.0
        %1852 = vmatpush1.msra.mxu0 0.0
        %1853 = vmatprep.subr.mxu0 0.0
        %1854 = vmatpush1.msra.mxu0 0.0
        %1855 = vmatprep.subr.mxu0 0.0
        %1856 = vmatpush1.msra.mxu0 0.0
        %1857 = vmatprep.subr.mxu0 0.0
        %1858 = vmatpush1.msra.mxu0 0.0
        %1859 = vmatprep.subr.mxu0 0.0
        %1860 = vmatpush1.msra.mxu0 0.0
        %1861 = vmatprep.subr.mxu0 0.0
        %1862 = vmatpush1.msra.mxu0 0.0
        %1863 = vmatprep.mubr.f32.mxu0 0.0
        %1864 = vmatmul.mubr.f32.gmra.mrb[0].mxu0 %v1797
        %v1865 = vpop.f32.mrb[0].mxu0
        %v1866 = vadd.f32 0.0, %v1865
        %v1867 = vpop.f32.mrb[0].mxu0
        %1868 = vdwg.mxu0
        %v1869 = vadd.f32 %v1777, %v1866
        %vm1870 = vcmask 24576
        %v1871 = vsel %vm1870, %v1869, -inf
        %1872 = vmax.xlane.f32.xlu0 %v1871
        %v1873 = vpop.xlane.xlu0 %1872
        %v1874 = vsub.f32 %v1869, %v1873
        %v1875 = vmul.f32 %v1874, 1.442695
        %v1876 = vpow.pop %v1875
        %v1877 = vsel %vm1870, %v1876, 0.0
        %1878 = vadd.xlane.f32.xlu0 %v1877
        %v1879 = vpop.xlane.xlu0 %1878
        %v1880 = vlog2.pop %v1879
        %v1881 = vmul.f32 %v1880, 0.6931472
        %v1882 = vsub.f32 %v1874, %v1881
        %1883 = vst.msk [vmem:[%s270] sm:$0x1] %vm1870, %v1882
        %s1884 = sand.u32 %s181, 1
        %s1885 = scalar_lea.sflag [#allocation6], %s1884
        %s1886 = sand.u32 %s181, 1
        %s1887 = scalar_lea.vmem [#allocation5], %s1886
        // Predicated region
        $region49: #{cnn_forward.1} parent=47 // pred_check
          %p1888 = pneg %p191
        $region50: #{cnn_forward.1} parent=47 // pred_check_branch
          %1890 = sbr.rel (%p1888) target = $region52
        $region51: #{cnn_forward.1} parent=47 // pred_region
          %s1892 = ssub.s32 16, 16
          %1893 = vsyncadd %s1885, %s1892
          %s1894 = smul.addr %s21, 16
          %s1895 = scalar_lea.hbm %s7, %s1894
          %s1897 = sshll.u32 %s1887, 4
          %s1898 = int_to_ptr.vmem [resolvable:$true] %s1897
          %1900 = dma.vmem_to_hbm [thread:$0]  %s1898, 16, %s1895, %s1885
        $region52: #{cnn_forward.1} parent=47 // pred_fallthru
          _
      $region48: #{cnn_forward.1} parent=5 // pred_fallthru
        _
      %p1901 = scmp.le.s32.totalorder 2, %s16
      // Predicated region
      $region53: #{cnn_forward.1} parent=5 // pred_check
        %p1902 = pneg %p1901
      $region54: #{cnn_forward.1} parent=5 // pred_check_branch
        %1904 = sbr.rel (%p1902) target = $region56
      $region55: #{cnn_forward.1} parent=5 // pred_region
        %s1905 = ssub.s32 %s16, 2
        // Predicated region
        $region57: #{cnn_forward.1} parent=55 // pred_check
          %p1906 = pneg %p197
        $region58: #{cnn_forward.1} parent=55 // pred_check_branch
          %1908 = sbr.rel (%p1906) target = $region60
        $region59: #{cnn_forward.1} parent=55 // pred_region
          %s1909 = sand.u32 %s182, 1
          %s1910 = scalar_lea.sflag [#allocation6], %s1909
          %s1911 = sand.u32 %s182, 1
          %s1912 = scalar_lea.vmem [#allocation5], %s1911
          %1913 = dma.done %s1910, 16
        $region60: #{cnn_forward.1} parent=55 // pred_fallthru
          _
      $region56: #{cnn_forward.1} parent=5 // pred_fallthru
        _
    $region6: #{cnn_forward.1} parent=1 // loop_footer
      %s20 = sadd.s32 1, %s16
    $region7: #{cnn_forward.1} parent=1 // loop_footer_branch
      %15 = sbr.rel target = $region3
    $region8: #{cnn_forward.1} parent=1 // loop_exit
      _
    %1914 = vsyncpa [#allocation6], 1
    %s1915 = scalar_lea.sflag [#allocation6], 1
    %1916 = vsyncpa %s1915, 1

</llo_original>
